<compile_context>
chip_gen: v5e
topology: v5e:2x2
jax: 0.10.0
libtpu: 0.0.40
codegen_flags: <defaults>
</compile_context>

<pallas_src>
import jax
import jax.numpy as jnp
from jax.experimental import pallas as pl
from jax.experimental.pallas import tpu as pltpu

EPS = 1e-5  # torch.nn.BatchNorm2d default eps


def _round_up(x, m):
    return ((x + m - 1) // m) * m


def _pick_tile(total, multiple, cap):
    """Largest divisor of `total` that is a multiple of `multiple` and <= cap."""
    best = None
    t = multiple
    cap = min(cap, total)
    while t <= cap:
        if total % t == 0:
            best = t
        t += multiple
    return best


def _make_conv_stats_kernel(W, T):
    """Fused 3x3 conv on the upsampled plane + per-(batch, tile) BN partials."""
    def kernel(wcol_ref, w_ref, xb_ref, xh_ref, y_ref, stat_ref):
        # Hoisted horizontal wrap masks (the only masks left; vertical borders
        # are zero rows baked into the stored plane).
        wcol = wcol_ref[...]                       # (1, T) int32 column index
        not_left = wcol != 0                       # lanes whose dw=-1 tap is valid
        not_right = wcol != (W - 1)                # lanes whose dw=+1 tap is valid

        # body tile + one narrow halo strip -> (Cp, T + HALO) window
        window = jnp.concatenate([xb_ref[0], xh_ref[0]], axis=1)

        slabs = []
        for kh in range(3):
            for kw in range(3):
                off = kh * W + kw                  # static lane offset of this tap
                slab = window[:, off:off + T]
                if kw == 0:
                    slab = jnp.where(not_left, slab, 0)
                elif kw == 2:
                    slab = jnp.where(not_right, slab, 0)
                slabs.append(slab)
        slab_all = jnp.concatenate(slabs, axis=0)  # (9*Cp, T) bf16, sublane-stacked

        # single stacked-K MXU matmul: (Coutp, 9*Cp) x (9*Cp, T) -> f32
        acc = jnp.dot(w_ref[...], slab_all, preferred_element_type=jnp.float32)

        y_ref[0] = acc.astype(y_ref.dtype)         # bf16 intermediate
        # per-(batch, tile) partial BN statistics: [sum, sum of squares]
        stat_ref[0, 0] = jnp.concatenate(
            [jnp.sum(acc, axis=1, keepdims=True),
             jnp.sum(acc * acc, axis=1, keepdims=True)], axis=1)
    return kernel


def _bn_relu_kernel(y_ref, scale_ref, shift_ref, o_ref):
    y = y_ref[0].astype(jnp.float32)
    o_ref[0] = jnp.maximum(y * scale_ref[...] + shift_ref[...], 0.0)


@jax.jit
def upsample_conv_forward(x_nchw, w, b, gamma, beta):
    """x_nchw: (N, Cin, H0, W0) f32 -> (N, Cout, 2*H0, 2*W0) f32."""
    # Conv bias is exactly cancelled by training-mode BatchNorm mean
    # subtraction, so it never affects this forward output: drop it.
    del b
    N, Cin, H0, W0 = x_nchw.shape
    Cout = w.shape[0]
    H, W = 2 * H0, 2 * W0
    HW = H * W
    Cp = _round_up(Cin, 16)            # bf16 sublane packing (16, 128)
    Coutp = _round_up(Cout, 8)         # f32 sublane multiple
    HALO = _round_up(2 * W + 2, 128)   # lanes a tile reaches past its own end

    # --- glue (one cheap pass over the small pre-conv input): bf16 cast,
    #     nearest-x2 upsample in NCHW order, channel pad, flatten, and
    #     shift-pad the flat plane: [1 zero][W zeros (top row)][H*W data][zeros]
    #     so conv tap (kh, kw) of output lane p lives at lane p + kh*W + kw.
    x_up = jnp.repeat(jnp.repeat(x_nchw.astype(jnp.bfloat16), 2, axis=2), 2, axis=3)
    x_flat = x_up.reshape(N, Cin, HW)
    lead = W + 1
    x_stored = jnp.pad(x_flat, ((0, 0), (0, Cp - Cin), (lead, HALO - lead)))
    # x_stored: (N, Cp, HW + HALO) bf16

    # conv weights -> one stacked-K matrix (Coutp, 9*Cp), tap-major (kh, kw, c)
    w9 = jnp.transpose(w, (2, 3, 0, 1))                          # (3,3,Cout,Cin)
    w9 = jnp.pad(w9, ((0, 0), (0, 0), (0, Coutp - Cout), (0, Cp - Cin)))
    w_flat = jnp.transpose(w9, (2, 0, 1, 3)).reshape(Coutp, 9 * Cp)
    w_flat = w_flat.astype(jnp.bfloat16)

    # per-lane column index (drives the two hoisted horizontal wrap masks)
    wcol_idx = (jnp.arange(HW, dtype=jnp.int32) % W).reshape(1, HW)

    # --- lane tile for kernel 1.  Cap 2048 keeps the (9*Cp, T) stacked slab
    #     plus the double-buffered streams well inside the 32 MiB scoped VMEM
    #     budget on every generation (v5e/v6e could raise both further).
    T = _pick_tile(HW, HALO, 2048)
    if T is not None:
        num_t = HW // T
        body_arr, halo_arr = x_stored, x_stored
        body_spec = pl.BlockSpec((1, Cp, T), lambda n, t: (n, 0, t))
        hstep = T // HALO
        halo_spec = pl.BlockSpec((1, Cp, HALO), lambda n, t: (n, 0, (t + 1) * hstep))
    else:
        # TODO(synk): planes whose area has no 128-aligned divisor fall back to
        # one (possibly lane-masked) tile per batch; pad HW for such shapes if
        # they ever matter for perf / VMEM.
        T, num_t = HW, 1
        body_arr = x_stored[:, :, :HW]
        halo_arr = x_stored[:, :, HW:]
        body_spec = pl.BlockSpec((1, Cp, HW), lambda n, t: (n, 0, 0))
        halo_spec = pl.BlockSpec((1, Cp, HALO), lambda n, t: (n, 0, 0))

    # --- kernel 1: fused upsampled-conv (single stacked-K matmul per tile)
    #     + per-(batch, tile) partial BN statistics.
    y, stats = pl.pallas_call(
        _make_conv_stats_kernel(W, T),
        out_shape=(jax.ShapeDtypeStruct((N, Coutp, HW), jnp.bfloat16),
                   jax.ShapeDtypeStruct((N, num_t, Coutp, 2), jnp.float32)),
        grid_spec=pltpu.PrefetchScalarGridSpec(
            num_scalar_prefetch=0,
            grid=(N, num_t),
            in_specs=[
                pl.BlockSpec((1, T), lambda n, t: (0, t)),           # wcol
                pl.BlockSpec((Coutp, 9 * Cp), lambda n, t: (0, 0)),  # weights (resident)
                body_spec,                                           # input tile
                halo_spec,                                           # narrow halo strip
            ],
            out_specs=[
                pl.BlockSpec((1, Coutp, T), lambda n, t: (n, 0, t)),
                pl.BlockSpec((1, 1, Coutp, 2), lambda n, t: (n, t, 0, 0)),
            ]),
        compiler_params=pltpu.CompilerParams(
            dimension_semantics=("parallel", "parallel"),
            vmem_limit_bytes=32 * 1024 * 1024),
    )(wcol_idx, w_flat, body_arr, halo_arr)

    # --- glue: fold batch statistics into per-channel scale / shift
    gamma_p = jnp.pad(gamma.astype(jnp.float32), (0, Coutp - Cout))
    beta_p = jnp.pad(beta.astype(jnp.float32), (0, Coutp - Cout))
    count = jnp.float32(N * HW)
    ssum = jnp.sum(stats, axis=(0, 1))                      # (Coutp, 2)
    mean = ssum[:, 0] / count
    var = ssum[:, 1] / count - mean * mean                  # biased var (training BN)
    inv_std = jax.lax.rsqrt(var + EPS)
    scale = (gamma_p * inv_std).reshape(Coutp, 1)
    shift = (beta_p - mean * gamma_p * inv_std).reshape(Coutp, 1)
    # TODO(synk): BatchNorm running_mean / running_var buffer updates are a
    # training-time side effect, not part of the forward output; skipped.

    # --- kernel 2: lane-dense streaming BN + ReLU epilogue (bf16 in, f32 out)
    T2 = _pick_tile(HW, 128, 8192) or HW
    num_t2 = HW // T2
    out = pl.pallas_call(
        _bn_relu_kernel,
        out_shape=jax.ShapeDtypeStruct((N, Coutp, HW), jnp.float32),
        grid_spec=pltpu.PrefetchScalarGridSpec(
            num_scalar_prefetch=0,
            grid=(N, num_t2),
            in_specs=[pl.BlockSpec((1, Coutp, T2), lambda n, t: (n, 0, t)),
                      pl.BlockSpec((Coutp, 1), lambda n, t: (0, 0)),
                      pl.BlockSpec((Coutp, 1), lambda n, t: (0, 0))],
            out_specs=pl.BlockSpec((1, Coutp, T2), lambda n, t: (n, 0, t))),
        compiler_params=pltpu.CompilerParams(
            dimension_semantics=("parallel", "parallel"),
            vmem_limit_bytes=32 * 1024 * 1024),
    )(y, scale, shift)

    out = out.reshape(N, Coutp, H, W)
    if Coutp != Cout:
        out = out[:, :Cout]
    return out


def _reference_forward(x_nchw, w, b, gamma, beta, cast_bf16):
    """Plain-JAX reference of the PyTorch forward."""
    x = jnp.repeat(jnp.repeat(x_nchw, 2, axis=2), 2, axis=3)
    wk = w
    if cast_bf16:
        x = x.astype(jnp.bfloat16)
        wk = w.astype(jnp.bfloat16)
    y = jax.lax.conv_general_dilated(
        x, wk, window_strides=(1, 1), padding=((1, 1), (1, 1)),
        dimension_numbers=("NCHW", "OIHW", "NCHW"),
        preferred_element_type=jnp.float32)
    y = y + b.reshape(1, -1, 1, 1)
    mean = jnp.mean(y, axis=(0, 2, 3), keepdims=True)
    var = jnp.mean((y - mean) ** 2, axis=(0, 2, 3), keepdims=True)
    y = (y - mean) * jax.lax.rsqrt(var + EPS)
    y = y * gamma.reshape(1, -1, 1, 1) + beta.reshape(1, -1, 1, 1)
    return jnp.maximum(y, 0.0)


if __name__ == "__main__":
    key = jax.random.PRNGKey(0)
    kx, kw, kb, kg, kbe = jax.random.split(key, 5)

    N, Cin, Cout, H0 = 2, 4, 8, 16
    x = jax.random.normal(kx, (N, Cin, H0, H0), dtype=jnp.float32)
    # Conv2d(in=4, out=8, k=3, padding='same') parameters (synthetic init)
    w = 0.1 * jax.random.normal(kw, (Cout, Cin, 3, 3), dtype=jnp.float32)
    b = 0.05 * jax.random.normal(kb, (Cout,), dtype=jnp.float32)
    # BatchNorm2d affine parameters (slightly non-trivial to exercise the path)
    gamma = 1.0 + 0.1 * jax.random.normal(kg, (Cout,), dtype=jnp.float32)
    beta = 0.05 * jax.random.normal(kbe, (Cout,), dtype=jnp.float32)

    out = jax.block_until_ready(upsample_conv_forward(x, w, b, gamma, beta))
    assert out.shape == (N, Cout, 2 * H0, 2 * H0), out.shape

    # Check against a reference that uses the same bf16 matmul inputs (the
    # kernel's deliberate precision trade-off; y is additionally bf16-rounded).
    ref_bf16 = _reference_forward(x, w, b, gamma, beta, cast_bf16=True)
    err16 = float(jnp.max(jnp.abs(out - ref_bf16)))
    assert jnp.allclose(out, ref_bf16, atol=3e-2, rtol=3e-2), err16

    # Looser sanity check against the pure-f32 PyTorch semantics.
    ref_f32 = _reference_forward(x, w, b, gamma, beta, cast_bf16=False)
    err32 = float(jnp.max(jnp.abs(out - ref_f32)))
    assert jnp.allclose(out, ref_f32, atol=8e-2, rtol=8e-2), err32

    print("KERNEL_OK")
</pallas_src>

<mosaic_0001>
module attributes {stable_mosaic.version = 11 : i64} {
  func.func @kernel(%arg0: i32, %arg1: i32, %arg2: memref<1x1024xi32, #tpu.memory_space<vmem>>, %arg3: memref<8x144xbf16, #tpu.memory_space<vmem>>, %arg4: memref<1x16x1024xbf16, #tpu.memory_space<vmem>>, %arg5: memref<1x16x128xbf16, #tpu.memory_space<vmem>>, %arg6: memref<1x8x1024xbf16, #tpu.memory_space<vmem>>, %arg7: memref<1x1x8x2xf32, #tpu.memory_space<vmem>>) attributes {dimension_semantics = [#tpu.dimension_semantics<parallel>, #tpu.dimension_semantics<parallel>], iteration_bounds = array<i64: 2, 1>, scalar_prefetch = 0 : i64, scratch_operands = 0 : i64, tpu.core_type = #tpu.core_type<tc>, window_params = [{transform_indices = @transform_0, window_bounds = array<i64: 1, 1024>}, {pipeline_mode = #tpu.pipeline_mode<synchronous>, transform_indices = @transform_1, window_bounds = array<i64: 8, 144>}, {transform_indices = @transform_2, window_bounds = array<i64: 1, 16, 1024>}, {transform_indices = @transform_3, window_bounds = array<i64: 1, 16, 128>}, {transform_indices = @transform_4, window_bounds = array<i64: 1, 8, 1024>}, {transform_indices = @transform_5, window_bounds = array<i64: 1, 1, 8, 2>}]} {
    %c0 = arith.constant 0 : index
    %c0_0 = arith.constant 0 : index
    %0 = vector.load %arg2[%c0, %c0_0] : memref<1x1024xi32, #tpu.memory_space<vmem>>, vector<1x1024xi32>
    %c0_i32 = arith.constant 0 : i32
    %1 = vector.broadcast %c0_i32 : i32 to vector<1x1024xi32>
    %2 = arith.cmpi ne, %0, %1 : vector<1x1024xi32>
    %c31_i32 = arith.constant 31 : i32
    %3 = vector.broadcast %c31_i32 : i32 to vector<1x1024xi32>
    %4 = arith.cmpi ne, %0, %3 : vector<1x1024xi32>
    %c0_1 = arith.constant 0 : index
    %c0_2 = arith.constant 0 : index
    %c0_3 = arith.constant 0 : index
    %5 = vector.load %arg4[%c0_1, %c0_2, %c0_3] : memref<1x16x1024xbf16, #tpu.memory_space<vmem>>, vector<1x16x1024xbf16>
    %6 = vector.shape_cast %5 : vector<1x16x1024xbf16> to vector<16x1024xbf16>
    %c0_4 = arith.constant 0 : index
    %c0_5 = arith.constant 0 : index
    %c0_6 = arith.constant 0 : index
    %7 = vector.load %arg5[%c0_4, %c0_5, %c0_6] : memref<1x16x128xbf16, #tpu.memory_space<vmem>>, vector<1x16x128xbf16>
    %8 = vector.shape_cast %7 : vector<1x16x128xbf16> to vector<16x128xbf16>
    %9 = tpu.concatenate %6, %8 in 1 : vector<16x1024xbf16>, vector<16x128xbf16> -> vector<16x1152xbf16>
    %10 = vector.extract_strided_slice %9 {offsets = [0, 0], sizes = [16, 1024], strides = [1, 1]} : vector<16x1152xbf16> to vector<16x1024xbf16>
    %c0_i32_7 = arith.constant 0 : i32
    %11 = arith.sitofp %c0_i32_7 : i32 to bf16
    %12 = vector.shape_cast %2 : vector<1x1024xi1> to vector<1x1024xi1>
    %13 = vector.broadcast %12 : vector<1x1024xi1> to vector<16x1024xi1>
    %14 = vector.broadcast %11 : bf16 to vector<16x1024xbf16>
    %15 = arith.select %13, %10, %14 : vector<16x1024xi1>, vector<16x1024xbf16>
    %16 = vector.extract_strided_slice %9 {offsets = [0, 1], sizes = [16, 1024], strides = [1, 1]} : vector<16x1152xbf16> to vector<16x1024xbf16>
    %17 = vector.extract_strided_slice %9 {offsets = [0, 2], sizes = [16, 1024], strides = [1, 1]} : vector<16x1152xbf16> to vector<16x1024xbf16>
    %c0_i32_8 = arith.constant 0 : i32
    %18 = arith.sitofp %c0_i32_8 : i32 to bf16
    %19 = vector.shape_cast %4 : vector<1x1024xi1> to vector<1x1024xi1>
    %20 = vector.broadcast %19 : vector<1x1024xi1> to vector<16x1024xi1>
    %21 = vector.broadcast %18 : bf16 to vector<16x1024xbf16>
    %22 = arith.select %20, %17, %21 : vector<16x1024xi1>, vector<16x1024xbf16>
    %23 = vector.extract_strided_slice %9 {offsets = [0, 32], sizes = [16, 1024], strides = [1, 1]} : vector<16x1152xbf16> to vector<16x1024xbf16>
    %c0_i32_9 = arith.constant 0 : i32
    %24 = arith.sitofp %c0_i32_9 : i32 to bf16
    %25 = vector.shape_cast %2 : vector<1x1024xi1> to vector<1x1024xi1>
    %26 = vector.broadcast %25 : vector<1x1024xi1> to vector<16x1024xi1>
    %27 = vector.broadcast %24 : bf16 to vector<16x1024xbf16>
    %28 = arith.select %26, %23, %27 : vector<16x1024xi1>, vector<16x1024xbf16>
    %29 = vector.extract_strided_slice %9 {offsets = [0, 33], sizes = [16, 1024], strides = [1, 1]} : vector<16x1152xbf16> to vector<16x1024xbf16>
    %30 = vector.extract_strided_slice %9 {offsets = [0, 34], sizes = [16, 1024], strides = [1, 1]} : vector<16x1152xbf16> to vector<16x1024xbf16>
    %c0_i32_10 = arith.constant 0 : i32
    %31 = arith.sitofp %c0_i32_10 : i32 to bf16
    %32 = vector.shape_cast %4 : vector<1x1024xi1> to vector<1x1024xi1>
    %33 = vector.broadcast %32 : vector<1x1024xi1> to vector<16x1024xi1>
    %34 = vector.broadcast %31 : bf16 to vector<16x1024xbf16>
    %35 = arith.select %33, %30, %34 : vector<16x1024xi1>, vector<16x1024xbf16>
    %36 = vector.extract_strided_slice %9 {offsets = [0, 64], sizes = [16, 1024], strides = [1, 1]} : vector<16x1152xbf16> to vector<16x1024xbf16>
    %c0_i32_11 = arith.constant 0 : i32
    %37 = arith.sitofp %c0_i32_11 : i32 to bf16
    %38 = vector.shape_cast %2 : vector<1x1024xi1> to vector<1x1024xi1>
    %39 = vector.broadcast %38 : vector<1x1024xi1> to vector<16x1024xi1>
    %40 = vector.broadcast %37 : bf16 to vector<16x1024xbf16>
    %41 = arith.select %39, %36, %40 : vector<16x1024xi1>, vector<16x1024xbf16>
    %42 = vector.extract_strided_slice %9 {offsets = [0, 65], sizes = [16, 1024], strides = [1, 1]} : vector<16x1152xbf16> to vector<16x1024xbf16>
    %43 = vector.extract_strided_slice %9 {offsets = [0, 66], sizes = [16, 1024], strides = [1, 1]} : vector<16x1152xbf16> to vector<16x1024xbf16>
    %c0_i32_12 = arith.constant 0 : i32
    %44 = arith.sitofp %c0_i32_12 : i32 to bf16
    %45 = vector.shape_cast %4 : vector<1x1024xi1> to vector<1x1024xi1>
    %46 = vector.broadcast %45 : vector<1x1024xi1> to vector<16x1024xi1>
    %47 = vector.broadcast %44 : bf16 to vector<16x1024xbf16>
    %48 = arith.select %46, %43, %47 : vector<16x1024xi1>, vector<16x1024xbf16>
    %49 = tpu.concatenate %15, %16, %22, %28, %29, %35, %41, %42, %48 in 0 : vector<16x1024xbf16>, vector<16x1024xbf16>, vector<16x1024xbf16>, vector<16x1024xbf16>, vector<16x1024xbf16>, vector<16x1024xbf16>, vector<16x1024xbf16>, vector<16x1024xbf16>, vector<16x1024xbf16> -> vector<144x1024xbf16>
    %c0_13 = arith.constant 0 : index
    %c0_14 = arith.constant 0 : index
    %50 = vector.load %arg3[%c0_13, %c0_14] : memref<8x144xbf16, #tpu.memory_space<vmem>>, vector<8x144xbf16>
    %cst = arith.constant dense<0.000000e+00> : vector<8x1024xf32>
    %51 = tpu.matmul %50, %49, %cst {dimension_numbers = #tpu.dot_dimension_numbers<[1], [0], [0], [1], [0, 0, 1, 1], [], []>} : vector<8x144xbf16>, vector<144x1024xbf16>, vector<8x1024xf32> -> vector<8x1024xf32>
    %52 = arith.truncf %51 : vector<8x1024xf32> to vector<8x1024xbf16>
    %c0_15 = arith.constant 0 : index
    %c0_16 = arith.constant 0 : index
    %c0_17 = arith.constant 0 : index
    %53 = vector.load %arg6[%c0_15, %c0_16, %c0_17] : memref<1x8x1024xbf16, #tpu.memory_space<vmem>>, vector<1x8x1024xbf16>
    %54 = vector.shape_cast %53 : vector<1x8x1024xbf16> to vector<8x1024xbf16>
    %55 = vector.shape_cast %52 : vector<8x1024xbf16> to vector<1x8x1024xbf16>
    tpu.vector_store %arg6[%c0_15, %c0_16, %c0_17], %55 {strides = array<i32>} : memref<1x8x1024xbf16, #tpu.memory_space<vmem>>, vector<1x8x1024xbf16>,
    %cst_18 = arith.constant dense<0.000000e+00> : vector<8xf32>
    %56 = vector.multi_reduction <add>, %51, %cst_18 [1] : vector<8x1024xf32> to vector<8xf32>
    %57 = vector.shape_cast %56 : vector<8xf32> to vector<8x1xf32>
    %58 = arith.mulf %51, %51 : vector<8x1024xf32>
    %cst_19 = arith.constant dense<0.000000e+00> : vector<8xf32>
    %59 = vector.multi_reduction <add>, %58, %cst_19 [1] : vector<8x1024xf32> to vector<8xf32>
    %60 = vector.shape_cast %59 : vector<8xf32> to vector<8x1xf32>
    %61 = tpu.concatenate %57, %60 in 1 : vector<8x1xf32>, vector<8x1xf32> -> vector<8x2xf32>
    %c0_20 = arith.constant 0 : index
    %c0_21 = arith.constant 0 : index
    %c0_22 = arith.constant 0 : index
    %c0_23 = arith.constant 0 : index
    %62 = vector.load %arg7[%c0_20, %c0_21, %c0_22, %c0_23] : memref<1x1x8x2xf32, #tpu.memory_space<vmem>>, vector<1x1x8x2xf32>
    %63 = vector.shape_cast %62 : vector<1x1x8x2xf32> to vector<8x2xf32>
    %64 = vector.shape_cast %61 : vector<8x2xf32> to vector<1x1x8x2xf32>
    tpu.vector_store %arg7[%c0_20, %c0_21, %c0_22, %c0_23], %64 {strides = array<i32>} : memref<1x1x8x2xf32, #tpu.memory_space<vmem>>, vector<1x1x8x2xf32>,
    return
  }
  func.func @transform_0(%arg0: i32, %arg1: i32) -> (i32, i32) {
    %c0_i32 = arith.constant 0 : i32
    %c0_i32_0 = arith.constant 0 : i32
    return %c0_i32, %arg1 : i32, i32
  }
  func.func @transform_1(%arg0: i32, %arg1: i32) -> (i32, i32) {
    %c0_i32 = arith.constant 0 : i32
    %c0_i32_0 = arith.constant 0 : i32
    %c0_i32_1 = arith.constant 0 : i32
    return %c0_i32, %c0_i32_0 : i32, i32
  }
  func.func @transform_2(%arg0: i32, %arg1: i32) -> (i32, i32, i32) {
    %c0_i32 = arith.constant 0 : i32
    %c0_i32_0 = arith.constant 0 : i32
    return %arg0, %c0_i32, %arg1 : i32, i32, i32
  }
  func.func @transform_3(%arg0: i32, %arg1: i32) -> (i32, i32, i32) {
    %c1_i32 = arith.constant 1 : i32
    %0 = arith.addi %arg1, %c1_i32 : i32
    %c8_i32 = arith.constant 8 : i32
    %1 = arith.muli %0, %c8_i32 : i32
    %c0_i32 = arith.constant 0 : i32
    %c0_i32_0 = arith.constant 0 : i32
    return %arg0, %c0_i32, %1 : i32, i32, i32
  }
  func.func @transform_4(%arg0: i32, %arg1: i32) -> (i32, i32, i32) {
    %c0_i32 = arith.constant 0 : i32
    %c0_i32_0 = arith.constant 0 : i32
    return %arg0, %c0_i32, %arg1 : i32, i32, i32
  }
  func.func @transform_5(%arg0: i32, %arg1: i32) -> (i32, i32, i32, i32) {
    %c0_i32 = arith.constant 0 : i32
    %c0_i32_0 = arith.constant 0 : i32
    %c0_i32_1 = arith.constant 0 : i32
    return %arg0, %arg1, %c0_i32, %c0_i32_0 : i32, i32, i32, i32
  }
}

module attributes {stable_mosaic.version = 11 : i64} {
  func.func @_bn_relu_kernel(%arg0: i32, %arg1: i32, %arg2: memref<1x8x1024xbf16, #tpu.memory_space<vmem>>, %arg3: memref<8x1xf32, #tpu.memory_space<vmem>>, %arg4: memref<8x1xf32, #tpu.memory_space<vmem>>, %arg5: memref<1x8x1024xf32, #tpu.memory_space<vmem>>) attributes {dimension_semantics = [#tpu.dimension_semantics<parallel>, #tpu.dimension_semantics<parallel>], iteration_bounds = array<i64: 2, 1>, scalar_prefetch = 0 : i64, scratch_operands = 0 : i64, tpu.core_type = #tpu.core_type<tc>, window_params = [{transform_indices = @transform_0, window_bounds = array<i64: 1, 8, 1024>}, {pipeline_mode = #tpu.pipeline_mode<synchronous>, transform_indices = @transform_1, window_bounds = array<i64: 8, 1>}, {pipeline_mode = #tpu.pipeline_mode<synchronous>, transform_indices = @transform_2, window_bounds = array<i64: 8, 1>}, {transform_indices = @transform_3, window_bounds = array<i64: 1, 8, 1024>}]} {
    %c0 = arith.constant 0 : index
    %c0_0 = arith.constant 0 : index
    %c0_1 = arith.constant 0 : index
    %0 = vector.load %arg2[%c0, %c0_0, %c0_1] : memref<1x8x1024xbf16, #tpu.memory_space<vmem>>, vector<1x8x1024xbf16>
    %1 = vector.shape_cast %0 : vector<1x8x1024xbf16> to vector<8x1024xbf16>
    %2 = arith.extf %1 : vector<8x1024xbf16> to vector<8x1024xf32>
    %c0_2 = arith.constant 0 : index
    %c0_3 = arith.constant 0 : index
    %3 = vector.load %arg3[%c0_2, %c0_3] : memref<8x1xf32, #tpu.memory_space<vmem>>, vector<8x1xf32>
    %4 = vector.broadcast %3 : vector<8x1xf32> to vector<8x1024xf32>
    %5 = arith.mulf %2, %4 : vector<8x1024xf32>
    %c0_4 = arith.constant 0 : index
    %c0_5 = arith.constant 0 : index
    %6 = vector.load %arg4[%c0_4, %c0_5] : memref<8x1xf32, #tpu.memory_space<vmem>>, vector<8x1xf32>
    %7 = vector.broadcast %6 : vector<8x1xf32> to vector<8x1024xf32>
    %8 = arith.addf %5, %7 : vector<8x1024xf32>
    %cst = arith.constant 0.000000e+00 : f32
    %9 = vector.broadcast %cst : f32 to vector<8x1024xf32>
    %10 = arith.maximumf %8, %9 : vector<8x1024xf32>
    %c0_6 = arith.constant 0 : index
    %c0_7 = arith.constant 0 : index
    %c0_8 = arith.constant 0 : index
    %11 = vector.load %arg5[%c0_6, %c0_7, %c0_8] : memref<1x8x1024xf32, #tpu.memory_space<vmem>>, vector<1x8x1024xf32>
    %12 = vector.shape_cast %11 : vector<1x8x1024xf32> to vector<8x1024xf32>
    %13 = vector.shape_cast %10 : vector<8x1024xf32> to vector<1x8x1024xf32>
    tpu.vector_store %arg5[%c0_6, %c0_7, %c0_8], %13 {strides = array<i32>} : memref<1x8x1024xf32, #tpu.memory_space<vmem>>, vector<1x8x1024xf32>,
    return
  }
  func.func @transform_0(%arg0: i32, %arg1: i32) -> (i32, i32, i32) {
    %c0_i32 = arith.constant 0 : i32
    %c0_i32_0 = arith.constant 0 : i32
    return %arg0, %c0_i32, %arg1 : i32, i32, i32
  }
  func.func @transform_1(%arg0: i32, %arg1: i32) -> (i32, i32) {
    %c0_i32 = arith.constant 0 : i32
    %c0_i32_0 = arith.constant 0 : i32
    %c0_i32_1 = arith.constant 0 : i32
    return %c0_i32, %c0_i32_0 : i32, i32
  }
  func.func @transform_2(%arg0: i32, %arg1: i32) -> (i32, i32) {
    %c0_i32 = arith.constant 0 : i32
    %c0_i32_0 = arith.constant 0 : i32
    %c0_i32_1 = arith.constant 0 : i32
    return %c0_i32, %c0_i32_0 : i32, i32
  }
  func.func @transform_3(%arg0: i32, %arg1: i32) -> (i32, i32, i32) {
    %c0_i32 = arith.constant 0 : i32
    %c0_i32_0 = arith.constant 0 : i32
    return %arg0, %c0_i32, %arg1 : i32, i32, i32
  }
}

</mosaic_0001>

<llo_original>
// kernel: upsample_conv_forward.3
$region0: #{upsample_conv_forward.3}
  #allocation0 [shape = 'u32[]', space=smem, size = 0x4, offset = 0x4, fixed_abs, tag = 'smem constant byte address 0x4 - core index']
  #allocation1 [shape = 'u32[72,128]{1,0:T(1,128)}', space=vmem, size = 0x9000, scoped, tag = 'internal scratch']
  %s0 = inlined_call_operand.vmem [shape: bf16[2,8,1024], index: 0, kind: input, shape index: {}]
  %s1 = inlined_call_operand.vmem [shape: f32[8,1], index: 1, kind: input, shape index: {}]
  %s2 = inlined_call_operand.vmem [shape: f32[8,1], index: 2, kind: input, shape index: {}]
  %s3 = inlined_call_operand.vmem [shape: f32[2,8,1024], index: 3, kind: output, shape index: {}]
  %s4 = sld [smem:[#allocation0]]
  $region45: #{upsample_conv_forward.3} parent=0
    _
  %s6 = ssub.s32 1, %s4
  %s7 = scalar_select 0, %s6, %s4
  loop: start=0, step=1, limit=4
  $region2: #{upsample_conv_forward.3} parent=0 // loop_pre_header
    _
  $region3: #{upsample_conv_forward.3} parent=0 // loop_header
    %s9 = sphi 0, %s13
    %p10 = scmp.ge.s32.totalorder %s9, 4
    %s16 = sphi 0, %s28
    %s17 = sphi 0, %s24
    %s18 = sphi 0, %s16
    %s19 = sphi 0, %s17
    %s20 = sphi 0, %s18
    %s21 = sphi 0, %s19
    %s33 = sphi 0, %s35
    %s36 = sphi 0, %s33
    %s37 = sphi 0, %s36
    %s53 = sphi 0, %s37
    %s57 = sphi 0, %s57
    %s59 = sphi 0, %s57
    %s60 = sphi 0, %s59
    %s74 = sphi 0, %s60
    %s78 = sphi 0, %s78
    %s80 = sphi 0, %s78
    %s81 = sphi 0, %s80
    %s95 = sphi 0, %s81
    %s103 = sphi 0, %s105
    %s106 = sphi 0, %s103
    %s107 = sphi 0, %s106
    %s123 = sphi 0, %s107
  $region4: #{upsample_conv_forward.3} parent=0 // loop_header_branch
    %12 = sbr.rel (%p10) target = $region8
  $region5: #{upsample_conv_forward.3} parent=0 // loop_body
    %s14 = ssub.s32 %s9, 1
    %s15 = ssub.s32 %s9, 2
    %s22 = sadd.s32 1, %s17
    %p23 = scmp.ge.s32.totalorder %s22, 1
    %s24 = scalar_select %p23, 0, %s22
    %s25 = sadd.s32 1, %s16
    %s26 = scalar_select %p23, %s25, %s16
    %p27 = scmp.ge.s32.totalorder %s26, 2
    %s28 = scalar_select %p27, 0, %s26
    %s29 = ssub.s32 %s16, %s28
    %s30 = ssub.s32 %s17, %s24
    %s31 = sor.u32 %s29, %s30
    %p32 = scmp.eq.s32.totalorder %s31, 0
    %s34 = sadd.s32 %s33, 1
    %s35 = scalar_select %p32, %s33, %s34
    %p38 = pneg %p32
    %p39 = scmp.eq.s32.totalorder %s9, 1
    %p40 = por %p38, %p39
    %p41 = scmp.ne.s32.totalorder %s33, %s36
    %p42 = scmp.eq.s32.totalorder %s9, 0
    %p43 = por %p41, %p42
    %p44 = scmp.ne.s32.totalorder %s33, %s36
    %p45 = scmp.eq.s32.totalorder %s14, 1
    %p46 = por %p44, %p45
    %p47 = scmp.ne.s32.totalorder %s36, %s37
    %p48 = scmp.eq.s32.totalorder %s14, 0
    %p49 = por %p47, %p48
    %p50 = scmp.ne.s32.totalorder %s36, %s37
    %p51 = scmp.eq.s32.totalorder %s15, 1
    %p52 = por %p50, %p51
    %p54 = scmp.ne.s32.totalorder %s37, %s53
    %p55 = scmp.eq.s32.totalorder %s15, 0
    %p56 = por %p54, %p55
    %s58 = sadd.s32 %s57, 1
    %p61 = scmp.eq.s32.totalorder %s9, 1
    %p62 = scmp.ne.s32.totalorder %s57, %s59
    %p63 = scmp.eq.s32.totalorder %s9, 0
    %p64 = por %p62, %p63
    %p65 = scmp.ne.s32.totalorder %s57, %s59
    %p66 = scmp.eq.s32.totalorder %s14, 1
    %p67 = por %p65, %p66
    %p68 = scmp.ne.s32.totalorder %s59, %s60
    %p69 = scmp.eq.s32.totalorder %s14, 0
    %p70 = por %p68, %p69
    %p71 = scmp.ne.s32.totalorder %s59, %s60
    %p72 = scmp.eq.s32.totalorder %s15, 1
    %p73 = por %p71, %p72
    %p75 = scmp.ne.s32.totalorder %s60, %s74
    %p76 = scmp.eq.s32.totalorder %s15, 0
    %p77 = por %p75, %p76
    %s79 = sadd.s32 %s78, 1
    %p82 = scmp.eq.s32.totalorder %s9, 1
    %p83 = scmp.ne.s32.totalorder %s78, %s80
    %p84 = scmp.eq.s32.totalorder %s9, 0
    %p85 = por %p83, %p84
    %p86 = scmp.ne.s32.totalorder %s78, %s80
    %p87 = scmp.eq.s32.totalorder %s14, 1
    %p88 = por %p86, %p87
    %p89 = scmp.ne.s32.totalorder %s80, %s81
    %p90 = scmp.eq.s32.totalorder %s14, 0
    %p91 = por %p89, %p90
    %p92 = scmp.ne.s32.totalorder %s80, %s81
    %p93 = scmp.eq.s32.totalorder %s15, 1
    %p94 = por %p92, %p93
    %p96 = scmp.ne.s32.totalorder %s81, %s95
    %p97 = scmp.eq.s32.totalorder %s15, 0
    %p98 = por %p96, %p97
    %s99 = ssub.s32 %s16, %s28
    %s100 = ssub.s32 %s17, %s24
    %s101 = sor.u32 %s99, %s100
    %p102 = scmp.eq.s32.totalorder %s101, 0
    %s104 = sadd.s32 %s103, 1
    %s105 = scalar_select %p102, %s103, %s104
    %p108 = pneg %p102
    %p109 = scmp.eq.s32.totalorder %s9, 1
    %p110 = por %p108, %p109
    %p111 = scmp.ne.s32.totalorder %s103, %s106
    %p112 = scmp.eq.s32.totalorder %s9, 0
    %p113 = por %p111, %p112
    %p114 = scmp.ne.s32.totalorder %s103, %s106
    %p115 = scmp.eq.s32.totalorder %s14, 1
    %p116 = por %p114, %p115
    %p117 = scmp.ne.s32.totalorder %s106, %s107
    %p118 = scmp.eq.s32.totalorder %s14, 0
    %p119 = por %p117, %p118
    %p120 = scmp.ne.s32.totalorder %s106, %s107
    %p121 = scmp.eq.s32.totalorder %s15, 1
    %p122 = por %p120, %p121
    %p124 = scmp.ne.s32.totalorder %s107, %s123
    %p125 = scmp.eq.s32.totalorder %s15, 0
    %p126 = por %p124, %p125
    %p127 = scmp.le.s32.totalorder 1, %s9
    %p128 = scmp.lt.s32.totalorder %s9, 3
    %p129 = pnand %p127, %p128
    %p130 = pneg %p129
    // Predicated region
    $region9: #{upsample_conv_forward.3} parent=5 // pred_check
      _
    $region10: #{upsample_conv_forward.3} parent=5 // pred_check_branch
      %132 = sbr.rel (%p129) target = $region12
    $region11: #{upsample_conv_forward.3} parent=5 // pred_region
      %s133 = ssub.s32 %s9, 1
      // Predicated region
      $region13: #{upsample_conv_forward.3} parent=11 // pred_check
        %p134 = pneg %p70
      $region14: #{upsample_conv_forward.3} parent=11 // pred_check_branch
        %136 = sbr.rel (%p134) target = $region16
      $region15: #{upsample_conv_forward.3} parent=11 // pred_region
        _
      $region16: #{upsample_conv_forward.3} parent=11 // pred_fallthru
        _
      // Predicated region
      $region17: #{upsample_conv_forward.3} parent=11 // pred_check
        %p137 = pneg %p91
      $region18: #{upsample_conv_forward.3} parent=11 // pred_check_branch
        %139 = sbr.rel (%p137) target = $region20
      $region19: #{upsample_conv_forward.3} parent=11 // pred_region
        _
      $region20: #{upsample_conv_forward.3} parent=11 // pred_fallthru
        _
    $region12: #{upsample_conv_forward.3} parent=5 // pred_fallthru
      _
    %p140 = scmp.lt.s32.totalorder %s9, 2
    // Predicated region
    $region21: #{upsample_conv_forward.3} parent=5 // pred_check
      %p141 = pneg %p140
    $region22: #{upsample_conv_forward.3} parent=5 // pred_check_branch
      %143 = sbr.rel (%p141) target = $region24
    $region23: #{upsample_conv_forward.3} parent=5 // pred_region
      // Predicated region
      $region25: #{upsample_conv_forward.3} parent=23 // pred_check
        %p144 = pneg %p43
      $region26: #{upsample_conv_forward.3} parent=23 // pred_check_branch
        %146 = sbr.rel (%p144) target = $region28
      $region27: #{upsample_conv_forward.3} parent=23 // pred_region
        %s147 = smul.u32 8, %s17
        %p148 = scmp.lt.s32.totalorder %s16, 1
        %s149 = scalar_select %p148, %s16, 1
        %p150 = scmp.lt.s32.totalorder %s147, 7
        %s151 = scalar_select %p150, %s147, 7
        %s152 = smul.addr %s149, 8
        %s153 = sadd.s32 %s151, %s152
        %s154 = smul.addr %s153, 4
        %s155 = scalar_lea.vmem %s0, %s154
        %s156 = smul.u32 8, %s17
      $region28: #{upsample_conv_forward.3} parent=23 // pred_fallthru
        _
    $region24: #{upsample_conv_forward.3} parent=5 // pred_fallthru
      _
    %p157 = scmp.le.s32.totalorder 1, %s9
    %p158 = scmp.lt.s32.totalorder %s9, 3
    %p159 = pnand %p157, %p158
    %p160 = pneg %p159
    // Predicated region
    $region29: #{upsample_conv_forward.3} parent=5 // pred_check
      _
    $region30: #{upsample_conv_forward.3} parent=5 // pred_check_branch
      %162 = sbr.rel (%p159) target = $region32
    $region31: #{upsample_conv_forward.3} parent=5 // pred_region
      %s163 = ssub.s32 %s9, 1
      %s164 = smul.u32 8, %s19
      %p165 = scmp.lt.s32.totalorder %s18, 1
      %s166 = scalar_select %p165, %s18, 1
      %p167 = scmp.lt.s32.totalorder %s164, 7
      %s168 = scalar_select %p167, %s164, 7
      %s169 = smul.addr %s166, 8
      %s170 = sadd.s32 %s168, %s169
      %s171 = smul.addr %s170, 4
      %s172 = scalar_lea.vmem %s0, %s171
      %p173 = pneg %p49
      %p174 = pneg %p46
      %p175 = pneg %p70
      %p176 = pneg %p67
      %p177 = pneg %p91
      %p178 = pneg %p88
      %p179 = pneg %p119
      %p180 = pneg %p116
      %s181 = smul.u32 8, %s19
      %p182 = scmp.lt.s32.totalorder %s18, 1
      %s183 = scalar_select %p182, %s18, 1
      %p184 = scmp.lt.s32.totalorder %s181, 7
      %s185 = scalar_select %p184, %s181, 7
      %s186 = smul.addr %s183, 8
      %s187 = sadd.s32 %s185, %s186
      %s188 = smul.addr %s187, 8
      %s189 = scalar_lea.vmem %s3, %s188
      %s190 = smul.u32 8, %s19
      %p191 = scmp.lt.s32.totalorder %s18, 1
      %s192 = scalar_select %p191, %s18, 1
      %p193 = scmp.lt.s32.totalorder %s190, 7
      %s194 = scalar_select %p193, %s190, 7
      %s195 = smul.addr %s192, 8
      %s196 = sadd.s32 %s194, %s195
      %s197 = smul.addr %s196, 4
      %s198 = scalar_lea.vmem %s0, %s197
      %s199 = smul.u32 8, %s19
      %s200 = smul.u32 8, %s19
      %p201 = scmp.lt.s32.totalorder %s18, 1
      %s202 = scalar_select %p201, %s18, 1
      %p203 = scmp.lt.s32.totalorder %s200, 7
      %s204 = scalar_select %p203, %s200, 7
      %s205 = smul.addr %s202, 8
      %s206 = sadd.s32 %s204, %s205
      %s207 = smul.addr %s206, 8
      %s208 = scalar_lea.vmem %s3, %s207
      %s209 = smul.u32 8, %s19
      %v210 = vld [vmem:[%s198] sm:$0xff]
      %v211 = vld [vmem:[%s198 + $0x8] sm:$0xff]
      %v212 = vld [vmem:[%s198 + $0x10] sm:$0xff]
      %v213 = vld [vmem:[%s198 + $0x18] sm:$0xff]
      %v214 = vunpack.c.l.bf16 %v210
      %v215 = vunpack.c.h.bf16 %v210
      %v216 = vunpack.c.l.bf16 %v211
      %v217 = vunpack.c.h.bf16 %v211
      %v218 = vunpack.c.l.bf16 %v212
      %v219 = vunpack.c.h.bf16 %v212
      %v220 = vunpack.c.l.bf16 %v213
      %v221 = vunpack.c.h.bf16 %v213
      %v222 = vld [vmem:[%s1] sm:$0xff]
      %224 = vset.pattern.permute.xlu0 0
      %225 = vperm.xlu0 %224, %v222
      %v226 = vpop.permute.xlu0 %225
      %v228 = vmul.f32 %v214, %v226
      %v229 = vmul.f32 %v215, %v226
      %v230 = vmul.f32 %v216, %v226
      %v231 = vmul.f32 %v217, %v226
      %v232 = vmul.f32 %v218, %v226
      %v233 = vmul.f32 %v219, %v226
      %v234 = vmul.f32 %v220, %v226
      %v235 = vmul.f32 %v221, %v226
      %v236 = vld [vmem:[%s2] sm:$0xff]
      %238 = vset.pattern.permute.xlu0 0
      %239 = vperm.xlu0 %238, %v236
      %v240 = vpop.permute.xlu0 %239
      %v242 = vadd.f32 %v228, %v240
      %v243 = vadd.f32 %v229, %v240
      %v244 = vadd.f32 %v230, %v240
      %v245 = vadd.f32 %v231, %v240
      %v246 = vadd.f32 %v232, %v240
      %v247 = vadd.f32 %v233, %v240
      %v248 = vadd.f32 %v234, %v240
      %v249 = vadd.f32 %v235, %v240
      %v250 = vmax.f32 %v242, 0.0
      %v251 = vmax.f32 %v243, 0.0
      %v252 = vmax.f32 %v244, 0.0
      %v253 = vmax.f32 %v245, 0.0
      %v254 = vmax.f32 %v246, 0.0
      %v255 = vmax.f32 %v247, 0.0
      %v256 = vmax.f32 %v248, 0.0
      %v257 = vmax.f32 %v249, 0.0
      %258 = vst [vmem:[%s208] sm:$0xff] %v250
      %259 = vst [vmem:[%s208 + $0x8] sm:$0xff] %v251
      %260 = vst [vmem:[%s208 + $0x10] sm:$0xff] %v252
      %261 = vst [vmem:[%s208 + $0x18] sm:$0xff] %v253
      %262 = vst [vmem:[%s208 + $0x20] sm:$0xff] %v254
      %263 = vst [vmem:[%s208 + $0x28] sm:$0xff] %v255
      %264 = vst [vmem:[%s208 + $0x30] sm:$0xff] %v256
      %265 = vst [vmem:[%s208 + $0x38] sm:$0xff] %v257
      %s266 = smul.u32 8, %s19
      %p267 = scmp.lt.s32.totalorder %s18, 1
      %s268 = scalar_select %p267, %s18, 1
      %p269 = scmp.lt.s32.totalorder %s266, 7
      %s270 = scalar_select %p269, %s266, 7
      %s271 = smul.addr %s268, 8
      %s272 = sadd.s32 %s270, %s271
      %s273 = smul.addr %s272, 8
      %s274 = scalar_lea.vmem %s3, %s273
      // Predicated region
      $region33: #{upsample_conv_forward.3} parent=31 // pred_check
        %p275 = pneg %p116
      $region34: #{upsample_conv_forward.3} parent=31 // pred_check_branch
        %277 = sbr.rel (%p275) target = $region36
      $region35: #{upsample_conv_forward.3} parent=31 // pred_region
        %s278 = smul.u32 8, %s19
      $region36: #{upsample_conv_forward.3} parent=31 // pred_fallthru
        _
    $region32: #{upsample_conv_forward.3} parent=5 // pred_fallthru
      _
    %p279 = scmp.le.s32.totalorder 2, %s9
    // Predicated region
    $region37: #{upsample_conv_forward.3} parent=5 // pred_check
      %p280 = pneg %p279
    $region38: #{upsample_conv_forward.3} parent=5 // pred_check_branch
      %282 = sbr.rel (%p280) target = $region40
    $region39: #{upsample_conv_forward.3} parent=5 // pred_region
      %s283 = ssub.s32 %s9, 2
      // Predicated region
      $region41: #{upsample_conv_forward.3} parent=39 // pred_check
        %p284 = pneg %p122
      $region42: #{upsample_conv_forward.3} parent=39 // pred_check_branch
        %286 = sbr.rel (%p284) target = $region44
      $region43: #{upsample_conv_forward.3} parent=39 // pred_region
        %s287 = smul.u32 8, %s21
        %p288 = scmp.lt.s32.totalorder %s20, 1
        %s289 = scalar_select %p288, %s20, 1
        %p290 = scmp.lt.s32.totalorder %s287, 7
        %s291 = scalar_select %p290, %s287, 7
        %s292 = smul.addr %s289, 8
        %s293 = sadd.s32 %s291, %s292
        %s294 = smul.addr %s293, 8
        %s295 = scalar_lea.vmem %s3, %s294
      $region44: #{upsample_conv_forward.3} parent=39 // pred_fallthru
        _
    $region40: #{upsample_conv_forward.3} parent=5 // pred_fallthru
      _
  $region6: #{upsample_conv_forward.3} parent=0 // loop_footer
    %s13 = sadd.s32 1, %s9
  $region7: #{upsample_conv_forward.3} parent=0 // loop_footer_branch
    %8 = sbr.rel target = $region3
  $region8: #{upsample_conv_forward.3} parent=0 // loop_exit
    _

// kernel: upsample_conv_forward.2
$region0: #{upsample_conv_forward.2}
  #allocation0 [shape = 'u32[]', space=smem, size = 0x4, offset = 0x4, fixed_abs, tag = 'smem constant byte address 0x4 - core index']
  #allocation1 [shape = 'u32[72,128]{1,0:T(1,128)}', space=vmem, size = 0x9000, scoped, tag = 'internal scratch']
  %s0 = inlined_call_operand.vmem [shape: s32[1,1024], index: 0, kind: input, shape index: {}]
  %s1 = inlined_call_operand.vmem [shape: bf16[8,144], index: 1, kind: input, shape index: {}]
  %s2 = inlined_call_operand.vmem [shape: bf16[2,16,1152], index: 2, kind: input, shape index: {}, may-alias: {2,3}]
  %s3 = inlined_call_operand.vmem [shape: bf16[2,16,1152], index: 3, kind: input, shape index: {}, may-alias: {2,3}]
  %s4 = inlined_call_operand.vmem [shape: bf16[2,8,1024], index: 4, kind: output, shape index: {0}]
  %s5 = inlined_call_operand.vmem [shape: f32[2,1,8,2], index: 5, kind: output, shape index: {1}]
  %6 = xla_tuple %s4, %s5
  %s7 = sld [smem:[#allocation0]]
  $region164: #{upsample_conv_forward.2} parent=0
    _
  %s9 = ssub.s32 1, %s7
  %s10 = scalar_select 0, %s9, %s7
  $region1: #{upsample_conv_forward.2} parent=0
    #allocation2 [shape = 'u8[65536]{0}', space=vmem, size = 0x10000, scoped, tag = 'input window, operand 2']
    #allocation3 [shape = 'u8[8192]{0}', space=vmem, size = 0x2000, scoped, tag = 'input window, operand 3']
    loop: start=0, step=1, limit=4
    $region2: #{upsample_conv_forward.2} parent=1 // loop_pre_header
      _
    $region3: #{upsample_conv_forward.2} parent=1 // loop_header
      %s12 = sphi 0, %s16
      %p13 = scmp.ge.s32.totalorder %s12, 4
      %s19 = sphi 0, %s31
      %s20 = sphi 0, %s27
      %s21 = sphi 0, %s19
      %s22 = sphi 0, %s20
      %s23 = sphi 0, %s21
      %s24 = sphi 0, %s22
      %s34 = sphi 0, %s36
      %s37 = sphi 0, %s34
      %s38 = sphi 0, %s37
      %s54 = sphi 0, %s38
      %s58 = sphi 0, %s58
      %s60 = sphi 0, %s58
      %s61 = sphi 0, %s60
      %s75 = sphi 0, %s61
      %s83 = sphi 0, %s85
      %s86 = sphi 0, %s83
      %s87 = sphi 0, %s86
      %s103 = sphi 0, %s87
      %s115 = sphi 0, %s117
      %s118 = sphi 0, %s115
      %s119 = sphi 0, %s118
      %s135 = sphi 0, %s119
      %s143 = sphi 0, %s145
      %s146 = sphi 0, %s143
      %s147 = sphi 0, %s146
      %s163 = sphi 0, %s147
      %s171 = sphi 0, %s173
      %s174 = sphi 0, %s171
      %s175 = sphi 0, %s174
      %s191 = sphi 0, %s175
    $region4: #{upsample_conv_forward.2} parent=1 // loop_header_branch
      %15 = sbr.rel (%p13) target = $region8
    $region5: #{upsample_conv_forward.2} parent=1 // loop_body
      %s17 = ssub.s32 %s12, 1
      %s18 = ssub.s32 %s12, 2
      %s25 = sadd.s32 1, %s20
      %p26 = scmp.ge.s32.totalorder %s25, 1
      %s27 = scalar_select %p26, 0, %s25
      %s28 = sadd.s32 1, %s19
      %s29 = scalar_select %p26, %s28, %s19
      %p30 = scmp.ge.s32.totalorder %s29, 2
      %s31 = scalar_select %p30, 0, %s29
      %s32 = ssub.s32 %s20, %s27
      %p33 = scmp.eq.s32.totalorder %s32, 0
      %s35 = sadd.s32 %s34, 1
      %s36 = scalar_select %p33, %s34, %s35
      %p39 = pneg %p33
      %p40 = scmp.eq.s32.totalorder %s12, 1
      %p41 = por %p39, %p40
      %p42 = scmp.ne.s32.totalorder %s34, %s37
      %p43 = scmp.eq.s32.totalorder %s12, 0
      %p44 = por %p42, %p43
      %p45 = scmp.ne.s32.totalorder %s34, %s37
      %p46 = scmp.eq.s32.totalorder %s17, 1
      %p47 = por %p45, %p46
      %p48 = scmp.ne.s32.totalorder %s37, %s38
      %p49 = scmp.eq.s32.totalorder %s17, 0
      %p50 = por %p48, %p49
      %p51 = scmp.ne.s32.totalorder %s37, %s38
      %p52 = scmp.eq.s32.totalorder %s18, 1
      %p53 = por %p51, %p52
      %p55 = scmp.ne.s32.totalorder %s38, %s54
      %p56 = scmp.eq.s32.totalorder %s18, 0
      %p57 = por %p55, %p56
      %s59 = sadd.s32 %s58, 1
      %p62 = scmp.eq.s32.totalorder %s12, 1
      %p63 = scmp.ne.s32.totalorder %s58, %s60
      %p64 = scmp.eq.s32.totalorder %s12, 0
      %p65 = por %p63, %p64
      %p66 = scmp.ne.s32.totalorder %s58, %s60
      %p67 = scmp.eq.s32.totalorder %s17, 1
      %p68 = por %p66, %p67
      %p69 = scmp.ne.s32.totalorder %s60, %s61
      %p70 = scmp.eq.s32.totalorder %s17, 0
      %p71 = por %p69, %p70
      %p72 = scmp.ne.s32.totalorder %s60, %s61
      %p73 = scmp.eq.s32.totalorder %s18, 1
      %p74 = por %p72, %p73
      %p76 = scmp.ne.s32.totalorder %s61, %s75
      %p77 = scmp.eq.s32.totalorder %s18, 0
      %p78 = por %p76, %p77
      %s79 = ssub.s32 %s19, %s31
      %s80 = ssub.s32 %s20, %s27
      %s81 = sor.u32 %s79, %s80
      %p82 = scmp.eq.s32.totalorder %s81, 0
      %s84 = sadd.s32 %s83, 1
      %s85 = scalar_select %p82, %s83, %s84
      %p88 = pneg %p82
      %p89 = scmp.eq.s32.totalorder %s12, 1
      %p90 = por %p88, %p89
      %p91 = scmp.ne.s32.totalorder %s83, %s86
      %p92 = scmp.eq.s32.totalorder %s12, 0
      %p93 = por %p91, %p92
      %p94 = scmp.ne.s32.totalorder %s83, %s86
      %p95 = scmp.eq.s32.totalorder %s17, 1
      %p96 = por %p94, %p95
      %p97 = scmp.ne.s32.totalorder %s86, %s87
      %p98 = scmp.eq.s32.totalorder %s17, 0
      %p99 = por %p97, %p98
      %p100 = scmp.ne.s32.totalorder %s86, %s87
      %p101 = scmp.eq.s32.totalorder %s18, 1
      %p102 = por %p100, %p101
      %p104 = scmp.ne.s32.totalorder %s87, %s103
      %p105 = scmp.eq.s32.totalorder %s18, 0
      %p106 = por %p104, %p105
      %s107 = sadd.s32 %s20, 1
      %s108 = smul.u32 %s107, 8
      %s109 = sadd.s32 %s27, 1
      %s110 = smul.u32 %s109, 8
      %s111 = ssub.s32 %s19, %s31
      %s112 = ssub.s32 %s108, %s110
      %s113 = sor.u32 %s111, %s112
      %p114 = scmp.eq.s32.totalorder %s113, 0
      %s116 = sadd.s32 %s115, 1
      %s117 = scalar_select %p114, %s115, %s116
      %p120 = pneg %p114
      %p121 = scmp.eq.s32.totalorder %s12, 1
      %p122 = por %p120, %p121
      %p123 = scmp.ne.s32.totalorder %s115, %s118
      %p124 = scmp.eq.s32.totalorder %s12, 0
      %p125 = por %p123, %p124
      %p126 = scmp.ne.s32.totalorder %s115, %s118
      %p127 = scmp.eq.s32.totalorder %s17, 1
      %p128 = por %p126, %p127
      %p129 = scmp.ne.s32.totalorder %s118, %s119
      %p130 = scmp.eq.s32.totalorder %s17, 0
      %p131 = por %p129, %p130
      %p132 = scmp.ne.s32.totalorder %s118, %s119
      %p133 = scmp.eq.s32.totalorder %s18, 1
      %p134 = por %p132, %p133
      %p136 = scmp.ne.s32.totalorder %s119, %s135
      %p137 = scmp.eq.s32.totalorder %s18, 0
      %p138 = por %p136, %p137
      %s139 = ssub.s32 %s19, %s31
      %s140 = ssub.s32 %s20, %s27
      %s141 = sor.u32 %s139, %s140
      %p142 = scmp.eq.s32.totalorder %s141, 0
      %s144 = sadd.s32 %s143, 1
      %s145 = scalar_select %p142, %s143, %s144
      %p148 = pneg %p142
      %p149 = scmp.eq.s32.totalorder %s12, 1
      %p150 = por %p148, %p149
      %p151 = scmp.ne.s32.totalorder %s143, %s146
      %p152 = scmp.eq.s32.totalorder %s12, 0
      %p153 = por %p151, %p152
      %p154 = scmp.ne.s32.totalorder %s143, %s146
      %p155 = scmp.eq.s32.totalorder %s17, 1
      %p156 = por %p154, %p155
      %p157 = scmp.ne.s32.totalorder %s146, %s147
      %p158 = scmp.eq.s32.totalorder %s17, 0
      %p159 = por %p157, %p158
      %p160 = scmp.ne.s32.totalorder %s146, %s147
      %p161 = scmp.eq.s32.totalorder %s18, 1
      %p162 = por %p160, %p161
      %p164 = scmp.ne.s32.totalorder %s147, %s163
      %p165 = scmp.eq.s32.totalorder %s18, 0
      %p166 = por %p164, %p165
      %s167 = ssub.s32 %s19, %s31
      %s168 = ssub.s32 %s20, %s27
      %s169 = sor.u32 %s167, %s168
      %p170 = scmp.eq.s32.totalorder %s169, 0
      %s172 = sadd.s32 %s171, 1
      %s173 = scalar_select %p170, %s171, %s172
      %p176 = pneg %p170
      %p177 = scmp.eq.s32.totalorder %s12, 1
      %p178 = por %p176, %p177
      %p179 = scmp.ne.s32.totalorder %s171, %s174
      %p180 = scmp.eq.s32.totalorder %s12, 0
      %p181 = por %p179, %p180
      %p182 = scmp.ne.s32.totalorder %s171, %s174
      %p183 = scmp.eq.s32.totalorder %s17, 1
      %p184 = por %p182, %p183
      %p185 = scmp.ne.s32.totalorder %s174, %s175
      %p186 = scmp.eq.s32.totalorder %s17, 0
      %p187 = por %p185, %p186
      %p188 = scmp.ne.s32.totalorder %s174, %s175
      %p189 = scmp.eq.s32.totalorder %s18, 1
      %p190 = por %p188, %p189
      %p192 = scmp.ne.s32.totalorder %s175, %s191
      %p193 = scmp.eq.s32.totalorder %s18, 0
      %p194 = por %p192, %p193
      %p195 = scmp.le.s32.totalorder 1, %s12
      %p196 = scmp.lt.s32.totalorder %s12, 3
      %p197 = pnand %p195, %p196
      %p198 = pneg %p197
      // Predicated region
      $region9: #{upsample_conv_forward.2} parent=5 // pred_check
        _
      $region10: #{upsample_conv_forward.2} parent=5 // pred_check_branch
        %200 = sbr.rel (%p197) target = $region12
      $region11: #{upsample_conv_forward.2} parent=5 // pred_region
        %s201 = ssub.s32 %s12, 1
        // Predicated region
        $region13: #{upsample_conv_forward.2} parent=11 // pred_check
          %p202 = pneg %p50
        $region14: #{upsample_conv_forward.2} parent=11 // pred_check_branch
          %204 = sbr.rel (%p202) target = $region16
        $region15: #{upsample_conv_forward.2} parent=11 // pred_region
          %s205 = smul.u32 8, %s22
          %p206 = scmp.lt.s32.totalorder %s205, 7
          %s207 = scalar_select %p206, %s205, 7
          %s208 = scalar_lea.vmem %s0, %s207
          %s209 = smul.u32 8, %s22
        $region16: #{upsample_conv_forward.2} parent=11 // pred_fallthru
          _
        // Predicated region
        $region17: #{upsample_conv_forward.2} parent=11 // pred_check
          %p210 = pneg %p71
        $region18: #{upsample_conv_forward.2} parent=11 // pred_check_branch
          %212 = sbr.rel (%p210) target = $region20
        $region19: #{upsample_conv_forward.2} parent=11 // pred_region
          _
        $region20: #{upsample_conv_forward.2} parent=11 // pred_fallthru
          _
      $region12: #{upsample_conv_forward.2} parent=5 // pred_fallthru
        _
      %p213 = scmp.lt.s32.totalorder %s12, 2
      // Predicated region
      $region21: #{upsample_conv_forward.2} parent=5 // pred_check
        %p214 = pneg %p213
      $region22: #{upsample_conv_forward.2} parent=5 // pred_check_branch
        %216 = sbr.rel (%p214) target = $region24
      $region23: #{upsample_conv_forward.2} parent=5 // pred_region
        // Predicated region
        $region25: #{upsample_conv_forward.2} parent=23 // pred_check
          %p217 = pneg %p93
        $region26: #{upsample_conv_forward.2} parent=23 // pred_check_branch
          %219 = sbr.rel (%p217) target = $region28
        $region27: #{upsample_conv_forward.2} parent=23 // pred_region
          %s220 = sand.u32 %s83, 1
          %s221 = sand.u32 %s83, 1
          %s222 = smul.addr %s221, 64
          %s223 = scalar_lea.vmem [#allocation2], %s222
          %s224 = smul.u32 8, %s20
          %s225 = ssub.s32 9, %s224
          %p226 = scmp.lt.s32.totalorder %s225, 8
          %s227 = scalar_select %p226, %s225, 8
          %s228 = smul.u32 8, %s227
          %p229 = scmp.ne.s32.totalorder 0, %s228
          %s230 = smul.addr %s19, 18
          %s231 = sadd.s32 %s224, %s230
          %s232 = smul.addr %s231, 4
          %s233 = scalar_lea.vmem %s2, %s232
          %s234 = smul.u32 %s227, 4
          // Predicated region
          $region29: #{upsample_conv_forward.2} parent=27 // pred_check
            %p235 = pneg %p229
          $region30: #{upsample_conv_forward.2} parent=27 // pred_check_branch
            %237 = sbr.rel (%p235) target = $region32
          $region31: #{upsample_conv_forward.2} parent=27 // pred_region
            %p238 = scmp.lt.u32.totalorder %s234, 8
            %p239 = pneg %p238
            // Predicated region
            $region33: #{upsample_conv_forward.2} parent=31 // pred_check
              _
            $region34: #{upsample_conv_forward.2} parent=31 // pred_check_branch
              %241 = sbr.rel (%p238) target = $region36
            $region35: #{upsample_conv_forward.2} parent=31 // pred_region
              %s259 = sand.u32 %s234, 7
              %p260 = scmp.eq.s32.totalorder %s259, 0
              // Predicated region
              $region48: #{upsample_conv_forward.2} parent=35 // pred_check
                %p261 = pneg %p260
              $region49: #{upsample_conv_forward.2} parent=35 // pred_check_branch
                %263 = sbr.rel (%p261) target = $region51
              $region50: #{upsample_conv_forward.2} parent=35 // pred_region
                %s264 = sshrl.u32 %s234, 3
                %s265 = sshrl.u32 %s264, 4
                // While loop
                $region52: #{upsample_conv_forward.2} parent=50 // loop_pre_header
                  _
                $region53: #{upsample_conv_forward.2} parent=50 // loop_header
                  %s267 = sphi 0, %s269
                  %p268 = scmp.ge.s32.totalorder %s267, %s265
                  %s272 = sphi 0, %s341
                  %s273 = sphi %s233, %s344
                  %s274 = sphi %s223, %s345
                $region54: #{upsample_conv_forward.2} parent=50 // loop_header_branch
                  %271 = sbr.rel (%p268) target = $region58
                $region55: #{upsample_conv_forward.2} parent=50 // loop_body
                  %v275 = vld [vmem:[%s273] sm:$0xff]
                  %276 = vst [vmem:[%s274] sm:$0xff] %v275
                  %v277 = vld [vmem:[%s273 + $0x8] sm:$0xff]
                  %278 = vst [vmem:[%s274 + $0x8] sm:$0xff] %v277
                  %v279 = vld [vmem:[%s273 + $0x10] sm:$0xff]
                  %280 = vst [vmem:[%s274 + $0x10] sm:$0xff] %v279
                  %v281 = vld [vmem:[%s273 + $0x18] sm:$0xff]
                  %282 = vst [vmem:[%s274 + $0x18] sm:$0xff] %v281
                  %v283 = vld [vmem:[%s273 + $0x20] sm:$0xff]
                  %284 = vst [vmem:[%s274 + $0x20] sm:$0xff] %v283
                  %v285 = vld [vmem:[%s273 + $0x28] sm:$0xff]
                  %286 = vst [vmem:[%s274 + $0x28] sm:$0xff] %v285
                  %v287 = vld [vmem:[%s273 + $0x30] sm:$0xff]
                  %288 = vst [vmem:[%s274 + $0x30] sm:$0xff] %v287
                  %v289 = vld [vmem:[%s273 + $0x38] sm:$0xff]
                  %290 = vst [vmem:[%s274 + $0x38] sm:$0xff] %v289
                  %v291 = vld [vmem:[%s273 + $0x40] sm:$0xff]
                  %292 = vst [vmem:[%s274 + $0x40] sm:$0xff] %v291
                  %v293 = vld [vmem:[%s273 + $0x48] sm:$0xff]
                  %294 = vst [vmem:[%s274 + $0x48] sm:$0xff] %v293
                  %v295 = vld [vmem:[%s273 + $0x50] sm:$0xff]
                  %296 = vst [vmem:[%s274 + $0x50] sm:$0xff] %v295
                  %v297 = vld [vmem:[%s273 + $0x58] sm:$0xff]
                  %298 = vst [vmem:[%s274 + $0x58] sm:$0xff] %v297
                  %v299 = vld [vmem:[%s273 + $0x60] sm:$0xff]
                  %300 = vst [vmem:[%s274 + $0x60] sm:$0xff] %v299
                  %v301 = vld [vmem:[%s273 + $0x68] sm:$0xff]
                  %302 = vst [vmem:[%s274 + $0x68] sm:$0xff] %v301
                  %v303 = vld [vmem:[%s273 + $0x70] sm:$0xff]
                  %304 = vst [vmem:[%s274 + $0x70] sm:$0xff] %v303
                  %v305 = vld [vmem:[%s273 + $0x78] sm:$0xff]
                  %306 = vst [vmem:[%s274 + $0x78] sm:$0xff] %v305
                  %v307 = vld [vmem:[%s273 + $0x24] sm:$0xff]
                  %308 = vst [vmem:[%s274 + $0x20] sm:$0xff] %v307
                  %v309 = vld [vmem:[%s273 + $0x2c] sm:$0xff]
                  %310 = vst [vmem:[%s274 + $0x28] sm:$0xff] %v309
                  %v311 = vld [vmem:[%s273 + $0x34] sm:$0xff]
                  %312 = vst [vmem:[%s274 + $0x30] sm:$0xff] %v311
                  %v313 = vld [vmem:[%s273 + $0x3c] sm:$0xff]
                  %314 = vst [vmem:[%s274 + $0x38] sm:$0xff] %v313
                  %v315 = vld [vmem:[%s273 + $0x44] sm:$0xff]
                  %316 = vst [vmem:[%s274 + $0x40] sm:$0xff] %v315
                  %v317 = vld [vmem:[%s273 + $0x4c] sm:$0xff]
                  %318 = vst [vmem:[%s274 + $0x48] sm:$0xff] %v317
                  %v319 = vld [vmem:[%s273 + $0x54] sm:$0xff]
                  %320 = vst [vmem:[%s274 + $0x50] sm:$0xff] %v319
                  %v321 = vld [vmem:[%s273 + $0x5c] sm:$0xff]
                  %322 = vst [vmem:[%s274 + $0x58] sm:$0xff] %v321
                  %v323 = vld [vmem:[%s273 + $0x64] sm:$0xff]
                  %324 = vst [vmem:[%s274 + $0x60] sm:$0xff] %v323
                  %v325 = vld [vmem:[%s273 + $0x6c] sm:$0xff]
                  %326 = vst [vmem:[%s274 + $0x68] sm:$0xff] %v325
                  %v327 = vld [vmem:[%s273 + $0x74] sm:$0xff]
                  %328 = vst [vmem:[%s274 + $0x70] sm:$0xff] %v327
                  %v329 = vld [vmem:[%s273 + $0x7c] sm:$0xff]
                  %330 = vst [vmem:[%s274 + $0x78] sm:$0xff] %v329
                  %v331 = vld [vmem:[%s273 + $0x84] sm:$0xff]
                  %332 = vst [vmem:[%s274 + $0x80] sm:$0xff] %v331
                  %v333 = vld [vmem:[%s273 + $0x8c] sm:$0xff]
                  %334 = vst [vmem:[%s274 + $0x88] sm:$0xff] %v333
                  %v335 = vld [vmem:[%s273 + $0x94] sm:$0xff]
                  %336 = vst [vmem:[%s274 + $0x90] sm:$0xff] %v335
                  %v337 = vld [vmem:[%s273 + $0x9c] sm:$0xff]
                  %338 = vst [vmem:[%s274 + $0x98] sm:$0xff] %v337
                  %s339 = sadd.s32 1, %s272
                  %p340 = scmp.ge.s32.totalorder %s339, %s265
                  %s341 = scalar_select %p340, 0, %s339
                  %s342 = smul.u32 %s341, 128
                  %s343 = smul.u32 %s341, 128
                  %s344 = scalar_lea.vmem %s233, %s342
                  %s345 = scalar_lea.vmem %s223, %s343 [#allocation2]
                $region56: #{upsample_conv_forward.2} parent=50 // loop_footer
                  %s269 = sadd.s32 %s267, 1
                $region57: #{upsample_conv_forward.2} parent=50 // loop_footer_branch
                  %266 = sbr.rel target = $region53
                $region58: #{upsample_conv_forward.2} parent=50 // loop_exit
                  _
                %s346 = sshrl.u32 %s264, 4
                %s347 = sand.u32 %s264, 15
                %s348 = smul.u32 %s346, 16
                %s349 = smul.u32 8, %s348
                %s350 = scalar_lea.vmem %s233, %s349
                %s351 = smul.u32 8, %s348
                %s352 = scalar_lea.vmem %s223, %s351 [#allocation2]
                // While loop
                $region59: #{upsample_conv_forward.2} parent=50 // loop_pre_header
                  _
                $region60: #{upsample_conv_forward.2} parent=50 // loop_header
                  %s354 = sphi 0, %s356
                  %p355 = scmp.ge.s32.totalorder %s354, %s347
                  %s359 = sphi 0, %s368
                  %s360 = sphi %s350, %s371
                  %s361 = sphi %s352, %s372
                $region61: #{upsample_conv_forward.2} parent=50 // loop_header_branch
                  %358 = sbr.rel (%p355) target = $region65
                $region62: #{upsample_conv_forward.2} parent=50 // loop_body
                  %v362 = vld [vmem:[%s360] sm:$0xff]
                  %363 = vst [vmem:[%s361] sm:$0xff] %v362
                  %v364 = vld [vmem:[%s360 + $0x24] sm:$0xff]
                  %365 = vst [vmem:[%s361 + $0x20] sm:$0xff] %v364
                  %s366 = sadd.s32 1, %s359
                  %p367 = scmp.ge.s32.totalorder %s366, %s347
                  %s368 = scalar_select %p367, 0, %s366
                  %s369 = smul.u32 %s368, 8
                  %s370 = smul.u32 %s368, 8
                  %s371 = scalar_lea.vmem %s350, %s369
                  %s372 = scalar_lea.vmem %s352, %s370 [#allocation2]
                $region63: #{upsample_conv_forward.2} parent=50 // loop_footer
                  %s356 = sadd.s32 %s354, 1
                $region64: #{upsample_conv_forward.2} parent=50 // loop_footer_branch
                  %353 = sbr.rel target = $region60
                $region65: #{upsample_conv_forward.2} parent=50 // loop_exit
                  _
              $region51: #{upsample_conv_forward.2} parent=35 // pred_fallthru
                _
              %p373 = pneg %p260
              // Predicated region
              $region66: #{upsample_conv_forward.2} parent=35 // pred_check
                _
              $region67: #{upsample_conv_forward.2} parent=35 // pred_check_branch
                %375 = sbr.rel (%p260) target = $region69
              $region68: #{upsample_conv_forward.2} parent=35 // pred_region
                %s376 = sand.u32 %s234, 7
                %s377 = ssub.s32 %s234, %s376
                %s378 = scalar_lea.vmem %s233, %s377
                %s379 = ssub.s32 %s234, %s376
                %s380 = scalar_lea.vmem %s223, %s379 [#allocation2]
                %s381 = sshrl.u32 %s234, 3
                %s382 = sshrl.u32 %s381, 4
                // While loop
                $region70: #{upsample_conv_forward.2} parent=68 // loop_pre_header
                  _
                $region71: #{upsample_conv_forward.2} parent=68 // loop_header
                  %s384 = sphi 0, %s386
                  %p385 = scmp.ge.s32.totalorder %s384, %s382
                  %s389 = sphi 0, %s458
                  %s390 = sphi %s233, %s461
                  %s391 = sphi %s223, %s462
                $region72: #{upsample_conv_forward.2} parent=68 // loop_header_branch
                  %388 = sbr.rel (%p385) target = $region76
                $region73: #{upsample_conv_forward.2} parent=68 // loop_body
                  %v392 = vld [vmem:[%s390] sm:$0xff]
                  %393 = vst [vmem:[%s391] sm:$0xff] %v392
                  %v394 = vld [vmem:[%s390 + $0x8] sm:$0xff]
                  %395 = vst [vmem:[%s391 + $0x8] sm:$0xff] %v394
                  %v396 = vld [vmem:[%s390 + $0x10] sm:$0xff]
                  %397 = vst [vmem:[%s391 + $0x10] sm:$0xff] %v396
                  %v398 = vld [vmem:[%s390 + $0x18] sm:$0xff]
                  %399 = vst [vmem:[%s391 + $0x18] sm:$0xff] %v398
                  %v400 = vld [vmem:[%s390 + $0x20] sm:$0xff]
                  %401 = vst [vmem:[%s391 + $0x20] sm:$0xff] %v400
                  %v402 = vld [vmem:[%s390 + $0x28] sm:$0xff]
                  %403 = vst [vmem:[%s391 + $0x28] sm:$0xff] %v402
                  %v404 = vld [vmem:[%s390 + $0x30] sm:$0xff]
                  %405 = vst [vmem:[%s391 + $0x30] sm:$0xff] %v404
                  %v406 = vld [vmem:[%s390 + $0x38] sm:$0xff]
                  %407 = vst [vmem:[%s391 + $0x38] sm:$0xff] %v406
                  %v408 = vld [vmem:[%s390 + $0x40] sm:$0xff]
                  %409 = vst [vmem:[%s391 + $0x40] sm:$0xff] %v408
                  %v410 = vld [vmem:[%s390 + $0x48] sm:$0xff]
                  %411 = vst [vmem:[%s391 + $0x48] sm:$0xff] %v410
                  %v412 = vld [vmem:[%s390 + $0x50] sm:$0xff]
                  %413 = vst [vmem:[%s391 + $0x50] sm:$0xff] %v412
                  %v414 = vld [vmem:[%s390 + $0x58] sm:$0xff]
                  %415 = vst [vmem:[%s391 + $0x58] sm:$0xff] %v414
                  %v416 = vld [vmem:[%s390 + $0x60] sm:$0xff]
                  %417 = vst [vmem:[%s391 + $0x60] sm:$0xff] %v416
                  %v418 = vld [vmem:[%s390 + $0x68] sm:$0xff]
                  %419 = vst [vmem:[%s391 + $0x68] sm:$0xff] %v418
                  %v420 = vld [vmem:[%s390 + $0x70] sm:$0xff]
                  %421 = vst [vmem:[%s391 + $0x70] sm:$0xff] %v420
                  %v422 = vld [vmem:[%s390 + $0x78] sm:$0xff]
                  %423 = vst [vmem:[%s391 + $0x78] sm:$0xff] %v422
                  %v424 = vld [vmem:[%s390 + $0x24] sm:$0xff]
                  %425 = vst [vmem:[%s391 + $0x20] sm:$0xff] %v424
                  %v426 = vld [vmem:[%s390 + $0x2c] sm:$0xff]
                  %427 = vst [vmem:[%s391 + $0x28] sm:$0xff] %v426
                  %v428 = vld [vmem:[%s390 + $0x34] sm:$0xff]
                  %429 = vst [vmem:[%s391 + $0x30] sm:$0xff] %v428
                  %v430 = vld [vmem:[%s390 + $0x3c] sm:$0xff]
                  %431 = vst [vmem:[%s391 + $0x38] sm:$0xff] %v430
                  %v432 = vld [vmem:[%s390 + $0x44] sm:$0xff]
                  %433 = vst [vmem:[%s391 + $0x40] sm:$0xff] %v432
                  %v434 = vld [vmem:[%s390 + $0x4c] sm:$0xff]
                  %435 = vst [vmem:[%s391 + $0x48] sm:$0xff] %v434
                  %v436 = vld [vmem:[%s390 + $0x54] sm:$0xff]
                  %437 = vst [vmem:[%s391 + $0x50] sm:$0xff] %v436
                  %v438 = vld [vmem:[%s390 + $0x5c] sm:$0xff]
                  %439 = vst [vmem:[%s391 + $0x58] sm:$0xff] %v438
                  %v440 = vld [vmem:[%s390 + $0x64] sm:$0xff]
                  %441 = vst [vmem:[%s391 + $0x60] sm:$0xff] %v440
                  %v442 = vld [vmem:[%s390 + $0x6c] sm:$0xff]
                  %443 = vst [vmem:[%s391 + $0x68] sm:$0xff] %v442
                  %v444 = vld [vmem:[%s390 + $0x74] sm:$0xff]
                  %445 = vst [vmem:[%s391 + $0x70] sm:$0xff] %v444
                  %v446 = vld [vmem:[%s390 + $0x7c] sm:$0xff]
                  %447 = vst [vmem:[%s391 + $0x78] sm:$0xff] %v446
                  %v448 = vld [vmem:[%s390 + $0x84] sm:$0xff]
                  %449 = vst [vmem:[%s391 + $0x80] sm:$0xff] %v448
                  %v450 = vld [vmem:[%s390 + $0x8c] sm:$0xff]
                  %451 = vst [vmem:[%s391 + $0x88] sm:$0xff] %v450
                  %v452 = vld [vmem:[%s390 + $0x94] sm:$0xff]
                  %453 = vst [vmem:[%s391 + $0x90] sm:$0xff] %v452
                  %v454 = vld [vmem:[%s390 + $0x9c] sm:$0xff]
                  %455 = vst [vmem:[%s391 + $0x98] sm:$0xff] %v454
                  %s456 = sadd.s32 1, %s389
                  %p457 = scmp.ge.s32.totalorder %s456, %s382
                  %s458 = scalar_select %p457, 0, %s456
                  %s459 = smul.u32 %s458, 128
                  %s460 = smul.u32 %s458, 128
                  %s461 = scalar_lea.vmem %s233, %s459
                  %s462 = scalar_lea.vmem %s223, %s460 [#allocation2]
                $region74: #{upsample_conv_forward.2} parent=68 // loop_footer
                  %s386 = sadd.s32 %s384, 1
                $region75: #{upsample_conv_forward.2} parent=68 // loop_footer_branch
                  %383 = sbr.rel target = $region71
                $region76: #{upsample_conv_forward.2} parent=68 // loop_exit
                  _
                %s463 = sshrl.u32 %s381, 4
                %s464 = sand.u32 %s381, 15
                %s465 = smul.u32 %s463, 16
                %s466 = smul.u32 8, %s465
                %s467 = scalar_lea.vmem %s233, %s466
                %s468 = smul.u32 8, %s465
                %s469 = scalar_lea.vmem %s223, %s468 [#allocation2]
                // While loop
                $region77: #{upsample_conv_forward.2} parent=68 // loop_pre_header
                  _
                $region78: #{upsample_conv_forward.2} parent=68 // loop_header
                  %s471 = sphi 0, %s473
                  %p472 = scmp.ge.s32.totalorder %s471, %s464
                  %s476 = sphi 0, %s485
                  %s477 = sphi %s467, %s488
                  %s478 = sphi %s469, %s489
                $region79: #{upsample_conv_forward.2} parent=68 // loop_header_branch
                  %475 = sbr.rel (%p472) target = $region83
                $region80: #{upsample_conv_forward.2} parent=68 // loop_body
                  %v479 = vld [vmem:[%s477] sm:$0xff]
                  %480 = vst [vmem:[%s478] sm:$0xff] %v479
                  %v481 = vld [vmem:[%s477 + $0x24] sm:$0xff]
                  %482 = vst [vmem:[%s478 + $0x20] sm:$0xff] %v481
                  %s483 = sadd.s32 1, %s476
                  %p484 = scmp.ge.s32.totalorder %s483, %s464
                  %s485 = scalar_select %p484, 0, %s483
                  %s486 = smul.u32 %s485, 8
                  %s487 = smul.u32 %s485, 8
                  %s488 = scalar_lea.vmem %s467, %s486
                  %s489 = scalar_lea.vmem %s469, %s487 [#allocation2]
                $region81: #{upsample_conv_forward.2} parent=68 // loop_footer
                  %s473 = sadd.s32 %s471, 1
                $region82: #{upsample_conv_forward.2} parent=68 // loop_footer_branch
                  %470 = sbr.rel target = $region78
                $region83: #{upsample_conv_forward.2} parent=68 // loop_exit
                  _
                %s490 = sshll.u32 1, %s376
                %s491 = ssub.s32 %s490, 1
                loop: start=0, step=1, limit=1
                $region84: #{upsample_conv_forward.2} parent=68 // loop_pre_header
                  _
                $region85: #{upsample_conv_forward.2} parent=68 // loop_header
                  %s493 = sphi 0, %s497
                  %p494 = scmp.ge.s32.totalorder %s493, 1
                  %s498 = sphi %s378, %s378
                  %s499 = sphi %s380, %s380
                $region86: #{upsample_conv_forward.2} parent=68 // loop_header_branch
                  %496 = sbr.rel (%p494) target = $region90
                $region87: #{upsample_conv_forward.2} parent=68 // loop_body
                  %v500 = vld [vmem:[%s498] sm:%s491]
                  %501 = vst [vmem:[%s499] sm:%s491] %v500
                  %v502 = vld [vmem:[%s498 + $0x24] sm:%s491]
                  %503 = vst [vmem:[%s499 + $0x20] sm:%s491] %v502
                $region88: #{upsample_conv_forward.2} parent=68 // loop_footer
                  %s497 = sadd.s32 1, %s493
                $region89: #{upsample_conv_forward.2} parent=68 // loop_footer_branch
                  %492 = sbr.rel target = $region85
                $region90: #{upsample_conv_forward.2} parent=68 // loop_exit
                  _
              $region69: #{upsample_conv_forward.2} parent=35 // pred_fallthru
                _
            $region36: #{upsample_conv_forward.2} parent=31 // pred_fallthru
              _
            // Predicated region
            $region37: #{upsample_conv_forward.2} parent=31 // pred_check
              %p242 = pneg %p238
            $region38: #{upsample_conv_forward.2} parent=31 // pred_check_branch
              %244 = sbr.rel (%p242) target = $region40
            $region39: #{upsample_conv_forward.2} parent=31 // pred_region
              %s245 = sshll.u32 1, %s234
              %s246 = ssub.s32 %s245, 1
              loop: start=0, step=1, limit=1
              $region41: #{upsample_conv_forward.2} parent=39 // loop_pre_header
                _
              $region42: #{upsample_conv_forward.2} parent=39 // loop_header
                %s248 = sphi 0, %s252
                %p249 = scmp.ge.s32.totalorder %s248, 1
                %s253 = sphi %s233, %s233
                %s254 = sphi %s223, %s223
              $region43: #{upsample_conv_forward.2} parent=39 // loop_header_branch
                %251 = sbr.rel (%p249) target = $region47
              $region44: #{upsample_conv_forward.2} parent=39 // loop_body
                %v255 = vld [vmem:[%s253] sm:%s246]
                %256 = vst [vmem:[%s254] sm:%s246] %v255
                %v257 = vld [vmem:[%s253 + $0x24] sm:%s246]
                %258 = vst [vmem:[%s254 + $0x20] sm:%s246] %v257
              $region45: #{upsample_conv_forward.2} parent=39 // loop_footer
                %s252 = sadd.s32 1, %s248
              $region46: #{upsample_conv_forward.2} parent=39 // loop_footer_branch
                %247 = sbr.rel target = $region42
              $region47: #{upsample_conv_forward.2} parent=39 // loop_exit
                _
            $region40: #{upsample_conv_forward.2} parent=31 // pred_fallthru
              _
          $region32: #{upsample_conv_forward.2} parent=27 // pred_fallthru
            _
          %504 = vnop
        $region28: #{upsample_conv_forward.2} parent=23 // pred_fallthru
          _
        // Predicated region
        $region91: #{upsample_conv_forward.2} parent=23 // pred_check
          %p505 = pneg %p125
        $region92: #{upsample_conv_forward.2} parent=23 // pred_check_branch
          %507 = sbr.rel (%p505) target = $region94
        $region93: #{upsample_conv_forward.2} parent=23 // pred_region
          %s508 = sand.u32 %s115, 1
          %s509 = sand.u32 %s115, 1
          %s510 = smul.addr %s509, 8
          %s511 = scalar_lea.vmem [#allocation3], %s510
          %s512 = sadd.s32 %s20, 1
          %s513 = smul.u32 %s512, 8
          %s514 = smul.addr %s19, 18
          %s515 = sadd.s32 %s513, %s514
          %s516 = smul.addr %s515, 4
          %s517 = scalar_lea.vmem %s3, %s516
          // Predicated region
          $region95: #{upsample_conv_forward.2} parent=93 // pred_check
            _
          $region96: #{upsample_conv_forward.2} parent=93 // pred_check_branch
            %519 = sbr.rel (0) target = $region98
          $region97: #{upsample_conv_forward.2} parent=93 // pred_region
            // Predicated region
            $region99: #{upsample_conv_forward.2} parent=97 // pred_check
              _
            $region100: #{upsample_conv_forward.2} parent=97 // pred_check_branch
              %521 = sbr.rel target = $region102
            $region101: #{upsample_conv_forward.2} parent=97 // pred_region
              // Predicated region
              $region114: #{upsample_conv_forward.2} parent=101 // pred_check
                _
              $region115: #{upsample_conv_forward.2} parent=101 // pred_check_branch
                %539 = sbr.rel (0) target = $region117
              $region116: #{upsample_conv_forward.2} parent=101 // pred_region
                loop: start=0, step=1, limit=1
                $region118: #{upsample_conv_forward.2} parent=116 // loop_pre_header
                  _
                $region119: #{upsample_conv_forward.2} parent=116 // loop_header
                  %s541 = sphi 0, %s545
                  %p542 = scmp.ge.s32.totalorder %s541, 1
                  %s546 = sphi %s517, %s517
                  %s547 = sphi %s511, %s511
                $region120: #{upsample_conv_forward.2} parent=116 // loop_header_branch
                  %544 = sbr.rel (%p542) target = $region124
                $region121: #{upsample_conv_forward.2} parent=116 // loop_body
                  _
                $region122: #{upsample_conv_forward.2} parent=116 // loop_footer
                  %s545 = sadd.s32 1, %s541
                $region123: #{upsample_conv_forward.2} parent=116 // loop_footer_branch
                  %540 = sbr.rel target = $region119
                $region124: #{upsample_conv_forward.2} parent=116 // loop_exit
                  _
                %s549 = ssub.s32 16, 1
                loop: start=0, step=1, limit=1
                $region125: #{upsample_conv_forward.2} parent=116 // loop_pre_header
                  _
                $region126: #{upsample_conv_forward.2} parent=116 // loop_header
                  %s551 = sphi 0, %s555
                  %p552 = scmp.ge.s32.totalorder %s551, 1
                  %s556 = sphi %s517, %s517
                  %s557 = sphi %s511, %s511
                $region127: #{upsample_conv_forward.2} parent=116 // loop_header_branch
                  %554 = sbr.rel (%p552) target = $region131
                $region128: #{upsample_conv_forward.2} parent=116 // loop_body
                  %v558 = vld [vmem:[%s556] sm:%s549]
                  %559 = vst [vmem:[%s557] sm:%s549] %v558
                  %v560 = vld [vmem:[%s556 + $0x24] sm:%s549]
                  %561 = vst [vmem:[%s557 + $0x4] sm:%s549] %v560
                $region129: #{upsample_conv_forward.2} parent=116 // loop_footer
                  %s555 = sadd.s32 1, %s551
                $region130: #{upsample_conv_forward.2} parent=116 // loop_footer_branch
                  %550 = sbr.rel target = $region126
                $region131: #{upsample_conv_forward.2} parent=116 // loop_exit
                  _
              $region117: #{upsample_conv_forward.2} parent=101 // pred_fallthru
                _
            $region102: #{upsample_conv_forward.2} parent=97 // pred_fallthru
              _
            // Predicated region
            $region103: #{upsample_conv_forward.2} parent=97 // pred_check
              _
            $region104: #{upsample_conv_forward.2} parent=97 // pred_check_branch
              %523 = sbr.rel (0) target = $region106
            $region105: #{upsample_conv_forward.2} parent=97 // pred_region
              %s525 = ssub.s32 16, 1
              loop: start=0, step=1, limit=1
              $region107: #{upsample_conv_forward.2} parent=105 // loop_pre_header
                _
              $region108: #{upsample_conv_forward.2} parent=105 // loop_header
                %s527 = sphi 0, %s531
                %p528 = scmp.ge.s32.totalorder %s527, 1
                %s532 = sphi %s517, %s517
                %s533 = sphi %s511, %s511
              $region109: #{upsample_conv_forward.2} parent=105 // loop_header_branch
                %530 = sbr.rel (%p528) target = $region113
              $region110: #{upsample_conv_forward.2} parent=105 // loop_body
                %v534 = vld [vmem:[%s532] sm:%s525]
                %535 = vst [vmem:[%s533] sm:%s525] %v534
                %v536 = vld [vmem:[%s532 + $0x24] sm:%s525]
                %537 = vst [vmem:[%s533 + $0x4] sm:%s525] %v536
              $region111: #{upsample_conv_forward.2} parent=105 // loop_footer
                %s531 = sadd.s32 1, %s527
              $region112: #{upsample_conv_forward.2} parent=105 // loop_footer_branch
                %526 = sbr.rel target = $region108
              $region113: #{upsample_conv_forward.2} parent=105 // loop_exit
                _
            $region106: #{upsample_conv_forward.2} parent=97 // pred_fallthru
              _
          $region98: #{upsample_conv_forward.2} parent=93 // pred_fallthru
            _
          %562 = vnop
        $region94: #{upsample_conv_forward.2} parent=23 // pred_fallthru
          _
      $region24: #{upsample_conv_forward.2} parent=5 // pred_fallthru
        _
      %p563 = scmp.le.s32.totalorder 1, %s12
      %p564 = scmp.lt.s32.totalorder %s12, 3
      %p565 = pnand %p563, %p564
      %p566 = pneg %p565
      // Predicated region
      $region132: #{upsample_conv_forward.2} parent=5 // pred_check
        _
      $region133: #{upsample_conv_forward.2} parent=5 // pred_check_branch
        %568 = sbr.rel (%p565) target = $region135
      $region134: #{upsample_conv_forward.2} parent=5 // pred_region
        %s569 = ssub.s32 %s12, 1
        %s570 = sand.u32 %s86, 1
        %s571 = sand.u32 %s86, 1
        %s572 = smul.addr %s571, 64
        %s573 = scalar_lea.vmem [#allocation2], %s572
        // Predicated region
        $region136: #{upsample_conv_forward.2} parent=134 // pred_check
          %p574 = pneg %p99
        $region137: #{upsample_conv_forward.2} parent=134 // pred_check_branch
          %576 = sbr.rel (%p574) target = $region139
        $region138: #{upsample_conv_forward.2} parent=134 // pred_region
          _
        $region139: #{upsample_conv_forward.2} parent=134 // pred_fallthru
          _
        %s577 = sand.u32 %s118, 1
        %s578 = sand.u32 %s118, 1
        %s579 = smul.addr %s578, 8
        %s580 = scalar_lea.vmem [#allocation3], %s579
        // Predicated region
        $region140: #{upsample_conv_forward.2} parent=134 // pred_check
          %p581 = pneg %p131
        $region141: #{upsample_conv_forward.2} parent=134 // pred_check_branch
          %583 = sbr.rel (%p581) target = $region143
        $region142: #{upsample_conv_forward.2} parent=134 // pred_region
          _
        $region143: #{upsample_conv_forward.2} parent=134 // pred_fallthru
          _
        %s584 = smul.u32 8, %s22
        %p585 = scmp.lt.s32.totalorder %s584, 7
        %s586 = scalar_select %p585, %s584, 7
        %s587 = scalar_lea.vmem %s0, %s586
        %p588 = pneg %p50
        %p589 = pneg %p47
        %p590 = pneg %p71
        %p591 = pneg %p68
        %s592 = sand.u32 %s86, 1
        %s593 = sand.u32 %s86, 1
        %s594 = smul.addr %s593, 64
        %s595 = scalar_lea.vmem [#allocation2], %s594
        %p596 = pneg %p99
        %p597 = pneg %p96
        %s598 = sand.u32 %s118, 1
        %s599 = sand.u32 %s118, 1
        %s600 = smul.addr %s599, 8
        %s601 = scalar_lea.vmem [#allocation3], %s600
        %p602 = pneg %p131
        %p603 = pneg %p128
        %p604 = pneg %p159
        %p605 = pneg %p156
        %s606 = smul.u32 8, %s22
        %p607 = scmp.lt.s32.totalorder %s21, 1
        %s608 = scalar_select %p607, %s21, 1
        %p609 = scmp.lt.s32.totalorder %s606, 7
        %s610 = scalar_select %p609, %s606, 7
        %s611 = smul.addr %s608, 8
        %s612 = sadd.s32 %s610, %s611
        %s613 = smul.addr %s612, 4
        %s614 = scalar_lea.vmem %s4, %s613
        %p615 = pneg %p187
        %p616 = pneg %p184
        %p617 = scmp.lt.s32.totalorder %s21, 1
        %s618 = scalar_select %p617, %s21, 1
        %p619 = scmp.lt.s32.totalorder %s22, 0
        %s620 = scalar_select %p619, %s22, 0
        %s621 = sadd.s32 %s620, %s618
        %s622 = smul.addr %s621, 8
        %s623 = scalar_lea.vmem %s5, %s622
        %s624 = smul.u32 8, %s22
        %p625 = scmp.lt.s32.totalorder %s624, 7
        %s626 = scalar_select %p625, %s624, 7
        %s627 = scalar_lea.vmem %s0, %s626
        %s628 = smul.u32 8, %s22
        %s629 = smul.u32 8, %s22
        %s630 = ssub.s32 9, %s629
        %p631 = scmp.lt.s32.totalorder %s630, 8
        %s632 = scalar_select %p631, %s630, 8
        %s633 = smul.u32 8, %s632
        %s634 = sadd.s32 %s22, 1
        %s635 = smul.u32 %s634, 8
        %s636 = smul.u32 8, %s22
        %p637 = scmp.lt.s32.totalorder %s21, 1
        %s638 = scalar_select %p637, %s21, 1
        %p639 = scmp.lt.s32.totalorder %s636, 7
        %s640 = scalar_select %p639, %s636, 7
        %s641 = smul.addr %s638, 8
        %s642 = sadd.s32 %s640, %s641
        %s643 = smul.addr %s642, 4
        %s644 = scalar_lea.vmem %s4, %s643
        %s645 = smul.u32 8, %s22
        %p646 = scmp.lt.s32.totalorder %s21, 1
        %s647 = scalar_select %p646, %s21, 1
        %p648 = scmp.lt.s32.totalorder %s22, 0
        %s649 = scalar_select %p648, %s22, 0
        %s650 = sadd.s32 %s649, %s647
        %s651 = smul.addr %s650, 8
        %s652 = scalar_lea.vmem %s5, %s651
        %v656 = vld [vmem:[%s627] sm:$0xff]
        %vm657 = vcmp.ne.s32.totalorder %v656, 0
        %vm658 = vcmp.ne.s32.totalorder %v656, 31
        %v659 = vld [vmem:[%s573] sm:$0xff]
        %v660 = vld [vmem:[%s573 + $0x8] sm:$0xff]
        %v661 = vld [vmem:[%s573 + $0x10] sm:$0xff]
        %v662 = vld [vmem:[%s573 + $0x18] sm:$0xff]
        %v663 = vld [vmem:[%s573 + $0x20] sm:$0xff]
        %v664 = vld [vmem:[%s573 + $0x28] sm:$0xff]
        %v665 = vld [vmem:[%s573 + $0x30] sm:$0xff]
        %v666 = vld [vmem:[%s573 + $0x38] sm:$0xff]
        %v667 = vld [vmem:[%s580] sm:$0xf]
        %v668 = vld [vmem:[%s580 + $0x4] sm:$0xf]
        %v677 = vunpack.c.l.b16 %v659
        %v678 = vunpack.c.h.b16 %v659
        %v679 = vunpack.c.l.b16 %v660
        %v680 = vunpack.c.h.b16 %v660
        %v681 = vunpack.c.l.b16 %v661
        %v682 = vunpack.c.h.b16 %v661
        %v683 = vunpack.c.l.b16 %v662
        %v684 = vunpack.c.h.b16 %v662
        %v685 = vunpack.c.l.b16 %v663
        %v686 = vunpack.c.h.b16 %v663
        %v687 = vunpack.c.l.b16 %v664
        %v688 = vunpack.c.h.b16 %v664
        %v689 = vunpack.c.l.b16 %v665
        %v690 = vunpack.c.h.b16 %v665
        %v691 = vunpack.c.l.b16 %v666
        %v692 = vunpack.c.h.b16 %v666
        %v693 = vpack.c.b16 %v685, %v677
        %v694 = vpack.c.b16 %v686, %v678
        %v695 = vpack.c.b16 %v687, %v679
        %v696 = vpack.c.b16 %v688, %v680
        %v697 = vpack.c.b16 %v689, %v681
        %v698 = vpack.c.b16 %v690, %v682
        %v699 = vpack.c.b16 %v691, %v683
        %v700 = vpack.c.b16 %v692, %v684
        %v711 = vunpack.c.l.b16 %v667
        %v712 = vunpack.c.l.b16 %v668
        %v713 = vpack.c.b16 %v712, %v711
        %v715 = vsel %vm657, 1, 0
        %v716 = vperm.slane %v715, 0
        %v717 = vperm.slane %v715, 1
        %v718 = vperm.slane %v715, 2
        %v719 = vperm.slane %v715, 3
        %v720 = vperm.slane %v715, 4
        %v721 = vperm.slane %v715, 5
        %v722 = vperm.slane %v715, 6
        %v723 = vperm.slane %v715, 7
        %vm724 = vcmp.eq.s32.totalorder %v716, 1
        %vm725 = vcmp.eq.s32.totalorder %v717, 1
        %vm726 = vcmp.eq.s32.totalorder %v718, 1
        %vm727 = vcmp.eq.s32.totalorder %v719, 1
        %vm728 = vcmp.eq.s32.totalorder %v720, 1
        %vm729 = vcmp.eq.s32.totalorder %v721, 1
        %vm730 = vcmp.eq.s32.totalorder %v722, 1
        %vm731 = vcmp.eq.s32.totalorder %v723, 1
        %vm732 = vmpackc.low %vm725, %vm724
        %vm733 = vmpackc.low %vm727, %vm726
        %vm734 = vmpackc.low %vm729, %vm728
        %vm735 = vmpackc.low %vm731, %vm730
        %v736 = vsel %vm732, 65537, 0
        %v737 = vsel %vm733, 65537, 0
        %v738 = vsel %vm734, 65537, 0
        %v739 = vsel %vm735, 65537, 0
        %v740 = vperm.slane %v736, 0
        %v741 = vperm.slane %v736, 4
        %v742 = vperm.slane %v737, 0
        %v743 = vperm.slane %v737, 4
        %v744 = vperm.slane %v738, 0
        %v745 = vperm.slane %v738, 4
        %v746 = vperm.slane %v739, 0
        %v747 = vperm.slane %v739, 4
        %v748 = vunpack.c.l.b16 %v740
        %v749 = vunpack.c.h.b16 %v740
        %v750 = vunpack.c.l.b16 0
        %v751 = vunpack.c.h.b16 0
        %vm752 = vcmp.ne.s32.totalorder %v748, %v750
        %vm753 = vcmp.ne.s32.totalorder %v749, %v751
        %vm754 = vmpackc.low %vm753, %vm752
        %v755 = vunpack.c.l.b16 %v741
        %v756 = vunpack.c.h.b16 %v741
        %v757 = vunpack.c.l.b16 0
        %v758 = vunpack.c.h.b16 0
        %vm759 = vcmp.ne.s32.totalorder %v755, %v757
        %vm760 = vcmp.ne.s32.totalorder %v756, %v758
        %vm761 = vmpackc.low %vm760, %vm759
        %v762 = vunpack.c.l.b16 %v742
        %v763 = vunpack.c.h.b16 %v742
        %v764 = vunpack.c.l.b16 0
        %v765 = vunpack.c.h.b16 0
        %vm766 = vcmp.ne.s32.totalorder %v762, %v764
        %vm767 = vcmp.ne.s32.totalorder %v763, %v765
        %vm768 = vmpackc.low %vm767, %vm766
        %v769 = vunpack.c.l.b16 %v743
        %v770 = vunpack.c.h.b16 %v743
        %v771 = vunpack.c.l.b16 0
        %v772 = vunpack.c.h.b16 0
        %vm773 = vcmp.ne.s32.totalorder %v769, %v771
        %vm774 = vcmp.ne.s32.totalorder %v770, %v772
        %vm775 = vmpackc.low %vm774, %vm773
        %v776 = vunpack.c.l.b16 %v744
        %v777 = vunpack.c.h.b16 %v744
        %v778 = vunpack.c.l.b16 0
        %v779 = vunpack.c.h.b16 0
        %vm780 = vcmp.ne.s32.totalorder %v776, %v778
        %vm781 = vcmp.ne.s32.totalorder %v777, %v779
        %vm782 = vmpackc.low %vm781, %vm780
        %v783 = vunpack.c.l.b16 %v745
        %v784 = vunpack.c.h.b16 %v745
        %v785 = vunpack.c.l.b16 0
        %v786 = vunpack.c.h.b16 0
        %vm787 = vcmp.ne.s32.totalorder %v783, %v785
        %vm788 = vcmp.ne.s32.totalorder %v784, %v786
        %vm789 = vmpackc.low %vm788, %vm787
        %v790 = vunpack.c.l.b16 %v746
        %v791 = vunpack.c.h.b16 %v746
        %v792 = vunpack.c.l.b16 0
        %v793 = vunpack.c.h.b16 0
        %vm794 = vcmp.ne.s32.totalorder %v790, %v792
        %vm795 = vcmp.ne.s32.totalorder %v791, %v793
        %vm796 = vmpackc.low %vm795, %vm794
        %v797 = vunpack.c.l.b16 %v747
        %v798 = vunpack.c.h.b16 %v747
        %v799 = vunpack.c.l.b16 0
        %v800 = vunpack.c.h.b16 0
        %vm801 = vcmp.ne.s32.totalorder %v797, %v799
        %vm802 = vcmp.ne.s32.totalorder %v798, %v800
        %vm803 = vmpackc.low %vm802, %vm801
        %v804 = vsel %vm754, %v693, 0
        %v805 = vsel %vm761, %v694, 0
        %v806 = vsel %vm768, %v695, 0
        %v807 = vsel %vm775, %v696, 0
        %v808 = vsel %vm782, %v697, 0
        %v809 = vsel %vm789, %v698, 0
        %v810 = vsel %vm796, %v699, 0
        %v811 = vsel %vm803, %v700, 0
        %v812 = vsel %vm658, 1, 0
        %v813 = vperm.slane %v812, 0
        %v814 = vperm.slane %v812, 1
        %v815 = vperm.slane %v812, 2
        %v816 = vperm.slane %v812, 3
        %v817 = vperm.slane %v812, 4
        %v818 = vperm.slane %v812, 5
        %v819 = vperm.slane %v812, 6
        %v820 = vperm.slane %v812, 7
        %vm821 = vcmp.eq.s32.totalorder %v813, 1
        %vm822 = vcmp.eq.s32.totalorder %v814, 1
        %vm823 = vcmp.eq.s32.totalorder %v815, 1
        %vm824 = vcmp.eq.s32.totalorder %v816, 1
        %vm825 = vcmp.eq.s32.totalorder %v817, 1
        %vm826 = vcmp.eq.s32.totalorder %v818, 1
        %vm827 = vcmp.eq.s32.totalorder %v819, 1
        %vm828 = vcmp.eq.s32.totalorder %v820, 1
        %vm829 = vmpackc.low %vm822, %vm821
        %vm830 = vmpackc.low %vm824, %vm823
        %vm831 = vmpackc.low %vm826, %vm825
        %vm832 = vmpackc.low %vm828, %vm827
        %v833 = vsel %vm829, 65537, 0
        %v834 = vsel %vm830, 65537, 0
        %v835 = vsel %vm831, 65537, 0
        %v836 = vsel %vm832, 65537, 0
        %v837 = vperm.slane %v833, 0
        %v838 = vperm.slane %v833, 4
        %v839 = vperm.slane %v834, 0
        %v840 = vperm.slane %v834, 4
        %v841 = vperm.slane %v835, 0
        %v842 = vperm.slane %v835, 4
        %v843 = vperm.slane %v836, 0
        %v844 = vperm.slane %v836, 4
        %845 = vrot.lane.b32.xlu0 %v837, 2
        %v846 = vpop.permute.xlu0 %845
        %847 = vrot.lane.b32.xlu0 %v838, 2
        %v848 = vpop.permute.xlu0 %847
        %849 = vrot.lane.b32.xlu0 %v839, 2
        %v850 = vpop.permute.xlu0 %849
        %851 = vrot.lane.b32.xlu0 %v840, 2
        %v852 = vpop.permute.xlu0 %851
        %853 = vrot.lane.b32.xlu0 %v841, 2
        %v854 = vpop.permute.xlu0 %853
        %855 = vrot.lane.b32.xlu0 %v842, 2
        %v856 = vpop.permute.xlu0 %855
        %857 = vrot.lane.b32.xlu0 %v843, 2
        %v858 = vpop.permute.xlu0 %857
        %859 = vrot.lane.b32.xlu0 %v844, 2
        %v860 = vpop.permute.xlu0 %859
        %vm861 = vcmask 15360
        %v862 = vsel %vm861, %v846, %v848
        %v863 = vsel %vm861, %v848, %v850
        %v864 = vsel %vm861, %v850, %v852
        %v865 = vsel %vm861, %v852, %v854
        %v866 = vsel %vm861, %v854, %v856
        %v867 = vsel %vm861, %v856, %v858
        %v868 = vsel %vm861, %v858, %v860
        %v869 = vunpack.c.l.b16 %v846
        %v870 = vunpack.c.h.b16 %v846
        %v871 = vunpack.c.l.b16 0
        %v872 = vunpack.c.h.b16 0
        %vm873 = vcmp.ne.s32.totalorder %v869, %v871
        %vm874 = vcmp.ne.s32.totalorder %v870, %v872
        %vm875 = vmpackc.low %vm874, %vm873
        %v876 = vunpack.c.l.b16 %v862
        %v877 = vunpack.c.h.b16 %v862
        %v878 = vunpack.c.l.b16 0
        %v879 = vunpack.c.h.b16 0
        %vm880 = vcmp.ne.s32.totalorder %v876, %v878
        %vm881 = vcmp.ne.s32.totalorder %v877, %v879
        %vm882 = vmpackc.low %vm881, %vm880
        %v883 = vunpack.c.l.b16 %v863
        %v884 = vunpack.c.h.b16 %v863
        %v885 = vunpack.c.l.b16 0
        %v886 = vunpack.c.h.b16 0
        %vm887 = vcmp.ne.s32.totalorder %v883, %v885
        %vm888 = vcmp.ne.s32.totalorder %v884, %v886
        %vm889 = vmpackc.low %vm888, %vm887
        %v890 = vunpack.c.l.b16 %v864
        %v891 = vunpack.c.h.b16 %v864
        %v892 = vunpack.c.l.b16 0
        %v893 = vunpack.c.h.b16 0
        %vm894 = vcmp.ne.s32.totalorder %v890, %v892
        %vm895 = vcmp.ne.s32.totalorder %v891, %v893
        %vm896 = vmpackc.low %vm895, %vm894
        %v897 = vunpack.c.l.b16 %v865
        %v898 = vunpack.c.h.b16 %v865
        %v899 = vunpack.c.l.b16 0
        %v900 = vunpack.c.h.b16 0
        %vm901 = vcmp.ne.s32.totalorder %v897, %v899
        %vm902 = vcmp.ne.s32.totalorder %v898, %v900
        %vm903 = vmpackc.low %vm902, %vm901
        %v904 = vunpack.c.l.b16 %v866
        %v905 = vunpack.c.h.b16 %v866
        %v906 = vunpack.c.l.b16 0
        %v907 = vunpack.c.h.b16 0
        %vm908 = vcmp.ne.s32.totalorder %v904, %v906
        %vm909 = vcmp.ne.s32.totalorder %v905, %v907
        %vm910 = vmpackc.low %vm909, %vm908
        %v911 = vunpack.c.l.b16 %v867
        %v912 = vunpack.c.h.b16 %v867
        %v913 = vunpack.c.l.b16 0
        %v914 = vunpack.c.h.b16 0
        %vm915 = vcmp.ne.s32.totalorder %v911, %v913
        %vm916 = vcmp.ne.s32.totalorder %v912, %v914
        %vm917 = vmpackc.low %vm916, %vm915
        %v918 = vunpack.c.l.b16 %v868
        %v919 = vunpack.c.h.b16 %v868
        %v920 = vunpack.c.l.b16 0
        %v921 = vunpack.c.h.b16 0
        %vm922 = vcmp.ne.s32.totalorder %v918, %v920
        %vm923 = vcmp.ne.s32.totalorder %v919, %v921
        %vm924 = vmpackc.low %vm923, %vm922
        %v925 = vunpack.c.l.b16 %v860
        %v926 = vunpack.c.h.b16 %v860
        %v927 = vunpack.c.l.b16 0
        %v928 = vunpack.c.h.b16 0
        %vm929 = vcmp.ne.s32.totalorder %v925, %v927
        %vm930 = vcmp.ne.s32.totalorder %v926, %v928
        %vm931 = vmpackc.low %vm930, %vm929
        %v932 = vsel %vm875, %v693, 0
        %v933 = vsel %vm882, %v694, 0
        %v934 = vsel %vm889, %v695, 0
        %v935 = vsel %vm896, %v696, 0
        %v936 = vsel %vm903, %v697, 0
        %v937 = vsel %vm910, %v698, 0
        %v938 = vsel %vm917, %v699, 0
        %v939 = vsel %vm924, %v700, 0
        %v940 = vsel %vm931, %v713, 0
        %941 = vrot.lane.b32.xlu0 %v740, 32
        %v942 = vpop.permute.xlu0 %941
        %943 = vrot.lane.b32.xlu0 %v741, 32
        %v944 = vpop.permute.xlu0 %943
        %945 = vrot.lane.b32.xlu0 %v742, 32
        %v946 = vpop.permute.xlu0 %945
        %947 = vrot.lane.b32.xlu0 %v743, 32
        %v948 = vpop.permute.xlu0 %947
        %949 = vrot.lane.b32.xlu0 %v744, 32
        %v950 = vpop.permute.xlu0 %949
        %951 = vrot.lane.b32.xlu0 %v745, 32
        %v952 = vpop.permute.xlu0 %951
        %953 = vrot.lane.b32.xlu0 %v746, 32
        %v954 = vpop.permute.xlu0 %953
        %955 = vrot.lane.b32.xlu0 %v747, 32
        %v956 = vpop.permute.xlu0 %955
        %vm957 = vcmask 261120
        %v958 = vsel %vm957, %v942, %v944
        %v959 = vsel %vm957, %v944, %v946
        %v960 = vsel %vm957, %v946, %v948
        %v961 = vsel %vm957, %v948, %v950
        %v962 = vsel %vm957, %v950, %v952
        %v963 = vsel %vm957, %v952, %v954
        %v964 = vsel %vm957, %v954, %v956
        %v965 = vunpack.c.l.b16 %v942
        %v966 = vunpack.c.h.b16 %v942
        %v967 = vunpack.c.l.b16 0
        %v968 = vunpack.c.h.b16 0
        %vm969 = vcmp.ne.s32.totalorder %v965, %v967
        %vm970 = vcmp.ne.s32.totalorder %v966, %v968
        %vm971 = vmpackc.low %vm970, %vm969
        %v972 = vunpack.c.l.b16 %v958
        %v973 = vunpack.c.h.b16 %v958
        %v974 = vunpack.c.l.b16 0
        %v975 = vunpack.c.h.b16 0
        %vm976 = vcmp.ne.s32.totalorder %v972, %v974
        %vm977 = vcmp.ne.s32.totalorder %v973, %v975
        %vm978 = vmpackc.low %vm977, %vm976
        %v979 = vunpack.c.l.b16 %v959
        %v980 = vunpack.c.h.b16 %v959
        %v981 = vunpack.c.l.b16 0
        %v982 = vunpack.c.h.b16 0
        %vm983 = vcmp.ne.s32.totalorder %v979, %v981
        %vm984 = vcmp.ne.s32.totalorder %v980, %v982
        %vm985 = vmpackc.low %vm984, %vm983
        %v986 = vunpack.c.l.b16 %v960
        %v987 = vunpack.c.h.b16 %v960
        %v988 = vunpack.c.l.b16 0
        %v989 = vunpack.c.h.b16 0
        %vm990 = vcmp.ne.s32.totalorder %v986, %v988
        %vm991 = vcmp.ne.s32.totalorder %v987, %v989
        %vm992 = vmpackc.low %vm991, %vm990
        %v993 = vunpack.c.l.b16 %v961
        %v994 = vunpack.c.h.b16 %v961
        %v995 = vunpack.c.l.b16 0
        %v996 = vunpack.c.h.b16 0
        %vm997 = vcmp.ne.s32.totalorder %v993, %v995
        %vm998 = vcmp.ne.s32.totalorder %v994, %v996
        %vm999 = vmpackc.low %vm998, %vm997
        %v1000 = vunpack.c.l.b16 %v962
        %v1001 = vunpack.c.h.b16 %v962
        %v1002 = vunpack.c.l.b16 0
        %v1003 = vunpack.c.h.b16 0
        %vm1004 = vcmp.ne.s32.totalorder %v1000, %v1002
        %vm1005 = vcmp.ne.s32.totalorder %v1001, %v1003
        %vm1006 = vmpackc.low %vm1005, %vm1004
        %v1007 = vunpack.c.l.b16 %v963
        %v1008 = vunpack.c.h.b16 %v963
        %v1009 = vunpack.c.l.b16 0
        %v1010 = vunpack.c.h.b16 0
        %vm1011 = vcmp.ne.s32.totalorder %v1007, %v1009
        %vm1012 = vcmp.ne.s32.totalorder %v1008, %v1010
        %vm1013 = vmpackc.low %vm1012, %vm1011
        %v1014 = vunpack.c.l.b16 %v964
        %v1015 = vunpack.c.h.b16 %v964
        %v1016 = vunpack.c.l.b16 0
        %v1017 = vunpack.c.h.b16 0
        %vm1018 = vcmp.ne.s32.totalorder %v1014, %v1016
        %vm1019 = vcmp.ne.s32.totalorder %v1015, %v1017
        %vm1020 = vmpackc.low %vm1019, %vm1018
        %v1021 = vunpack.c.l.b16 %v956
        %v1022 = vunpack.c.h.b16 %v956
        %v1023 = vunpack.c.l.b16 0
        %v1024 = vunpack.c.h.b16 0
        %vm1025 = vcmp.ne.s32.totalorder %v1021, %v1023
        %vm1026 = vcmp.ne.s32.totalorder %v1022, %v1024
        %vm1027 = vmpackc.low %vm1026, %vm1025
        %v1028 = vsel %vm971, %v693, 0
        %v1029 = vsel %vm978, %v694, 0
        %v1030 = vsel %vm985, %v695, 0
        %v1031 = vsel %vm992, %v696, 0
        %v1032 = vsel %vm999, %v697, 0
        %v1033 = vsel %vm1006, %v698, 0
        %v1034 = vsel %vm1013, %v699, 0
        %v1035 = vsel %vm1020, %v700, 0
        %v1036 = vsel %vm1027, %v713, 0
        %1037 = vrot.lane.b32.xlu0 %v837, 34
        %v1038 = vpop.permute.xlu0 %1037
        %1039 = vrot.lane.b32.xlu0 %v838, 34
        %v1040 = vpop.permute.xlu0 %1039
        %1041 = vrot.lane.b32.xlu0 %v839, 34
        %v1042 = vpop.permute.xlu0 %1041
        %1043 = vrot.lane.b32.xlu0 %v840, 34
        %v1044 = vpop.permute.xlu0 %1043
        %1045 = vrot.lane.b32.xlu0 %v841, 34
        %v1046 = vpop.permute.xlu0 %1045
        %1047 = vrot.lane.b32.xlu0 %v842, 34
        %v1048 = vpop.permute.xlu0 %1047
        %1049 = vrot.lane.b32.xlu0 %v843, 34
        %v1050 = vpop.permute.xlu0 %1049
        %1051 = vrot.lane.b32.xlu0 %v844, 34
        %v1052 = vpop.permute.xlu0 %1051
        %vm1053 = vcmask 277504
        %v1054 = vsel %vm1053, %v1038, %v1040
        %v1055 = vsel %vm1053, %v1040, %v1042
        %v1056 = vsel %vm1053, %v1042, %v1044
        %v1057 = vsel %vm1053, %v1044, %v1046
        %v1058 = vsel %vm1053, %v1046, %v1048
        %v1059 = vsel %vm1053, %v1048, %v1050
        %v1060 = vsel %vm1053, %v1050, %v1052
        %v1061 = vunpack.c.l.b16 %v1038
        %v1062 = vunpack.c.h.b16 %v1038
        %v1063 = vunpack.c.l.b16 0
        %v1064 = vunpack.c.h.b16 0
        %vm1065 = vcmp.ne.s32.totalorder %v1061, %v1063
        %vm1066 = vcmp.ne.s32.totalorder %v1062, %v1064
        %vm1067 = vmpackc.low %vm1066, %vm1065
        %v1068 = vunpack.c.l.b16 %v1054
        %v1069 = vunpack.c.h.b16 %v1054
        %v1070 = vunpack.c.l.b16 0
        %v1071 = vunpack.c.h.b16 0
        %vm1072 = vcmp.ne.s32.totalorder %v1068, %v1070
        %vm1073 = vcmp.ne.s32.totalorder %v1069, %v1071
        %vm1074 = vmpackc.low %vm1073, %vm1072
        %v1075 = vunpack.c.l.b16 %v1055
        %v1076 = vunpack.c.h.b16 %v1055
        %v1077 = vunpack.c.l.b16 0
        %v1078 = vunpack.c.h.b16 0
        %vm1079 = vcmp.ne.s32.totalorder %v1075, %v1077
        %vm1080 = vcmp.ne.s32.totalorder %v1076, %v1078
        %vm1081 = vmpackc.low %vm1080, %vm1079
        %v1082 = vunpack.c.l.b16 %v1056
        %v1083 = vunpack.c.h.b16 %v1056
        %v1084 = vunpack.c.l.b16 0
        %v1085 = vunpack.c.h.b16 0
        %vm1086 = vcmp.ne.s32.totalorder %v1082, %v1084
        %vm1087 = vcmp.ne.s32.totalorder %v1083, %v1085
        %vm1088 = vmpackc.low %vm1087, %vm1086
        %v1089 = vunpack.c.l.b16 %v1057
        %v1090 = vunpack.c.h.b16 %v1057
        %v1091 = vunpack.c.l.b16 0
        %v1092 = vunpack.c.h.b16 0
        %vm1093 = vcmp.ne.s32.totalorder %v1089, %v1091
        %vm1094 = vcmp.ne.s32.totalorder %v1090, %v1092
        %vm1095 = vmpackc.low %vm1094, %vm1093
        %v1096 = vunpack.c.l.b16 %v1058
        %v1097 = vunpack.c.h.b16 %v1058
        %v1098 = vunpack.c.l.b16 0
        %v1099 = vunpack.c.h.b16 0
        %vm1100 = vcmp.ne.s32.totalorder %v1096, %v1098
        %vm1101 = vcmp.ne.s32.totalorder %v1097, %v1099
        %vm1102 = vmpackc.low %vm1101, %vm1100
        %v1103 = vunpack.c.l.b16 %v1059
        %v1104 = vunpack.c.h.b16 %v1059
        %v1105 = vunpack.c.l.b16 0
        %v1106 = vunpack.c.h.b16 0
        %vm1107 = vcmp.ne.s32.totalorder %v1103, %v1105
        %vm1108 = vcmp.ne.s32.totalorder %v1104, %v1106
        %vm1109 = vmpackc.low %vm1108, %vm1107
        %v1110 = vunpack.c.l.b16 %v1060
        %v1111 = vunpack.c.h.b16 %v1060
        %v1112 = vunpack.c.l.b16 0
        %v1113 = vunpack.c.h.b16 0
        %vm1114 = vcmp.ne.s32.totalorder %v1110, %v1112
        %vm1115 = vcmp.ne.s32.totalorder %v1111, %v1113
        %vm1116 = vmpackc.low %vm1115, %vm1114
        %v1117 = vunpack.c.l.b16 %v1052
        %v1118 = vunpack.c.h.b16 %v1052
        %v1119 = vunpack.c.l.b16 0
        %v1120 = vunpack.c.h.b16 0
        %vm1121 = vcmp.ne.s32.totalorder %v1117, %v1119
        %vm1122 = vcmp.ne.s32.totalorder %v1118, %v1120
        %vm1123 = vmpackc.low %vm1122, %vm1121
        %v1124 = vsel %vm1067, %v693, 0
        %v1125 = vsel %vm1074, %v694, 0
        %v1126 = vsel %vm1081, %v695, 0
        %v1127 = vsel %vm1088, %v696, 0
        %v1128 = vsel %vm1095, %v697, 0
        %v1129 = vsel %vm1102, %v698, 0
        %v1130 = vsel %vm1109, %v699, 0
        %v1131 = vsel %vm1116, %v700, 0
        %v1132 = vsel %vm1123, %v713, 0
        %1133 = vrot.lane.b32.xlu0 %v740, 64
        %v1134 = vpop.permute.xlu0 %1133
        %1135 = vrot.lane.b32.xlu0 %v741, 64
        %v1136 = vpop.permute.xlu0 %1135
        %1137 = vrot.lane.b32.xlu0 %v742, 64
        %v1138 = vpop.permute.xlu0 %1137
        %1139 = vrot.lane.b32.xlu0 %v743, 64
        %v1140 = vpop.permute.xlu0 %1139
        %1141 = vrot.lane.b32.xlu0 %v744, 64
        %v1142 = vpop.permute.xlu0 %1141
        %1143 = vrot.lane.b32.xlu0 %v745, 64
        %v1144 = vpop.permute.xlu0 %1143
        %1145 = vrot.lane.b32.xlu0 %v746, 64
        %v1146 = vpop.permute.xlu0 %1145
        %1147 = vrot.lane.b32.xlu0 %v747, 64
        %v1148 = vpop.permute.xlu0 %1147
        %vm1149 = vcmask 523264
        %v1150 = vsel %vm1149, %v1134, %v1136
        %v1151 = vsel %vm1149, %v1136, %v1138
        %v1152 = vsel %vm1149, %v1138, %v1140
        %v1153 = vsel %vm1149, %v1140, %v1142
        %v1154 = vsel %vm1149, %v1142, %v1144
        %v1155 = vsel %vm1149, %v1144, %v1146
        %v1156 = vsel %vm1149, %v1146, %v1148
        %v1157 = vunpack.c.l.b16 %v1134
        %v1158 = vunpack.c.h.b16 %v1134
        %v1159 = vunpack.c.l.b16 0
        %v1160 = vunpack.c.h.b16 0
        %vm1161 = vcmp.ne.s32.totalorder %v1157, %v1159
        %vm1162 = vcmp.ne.s32.totalorder %v1158, %v1160
        %vm1163 = vmpackc.low %vm1162, %vm1161
        %v1164 = vunpack.c.l.b16 %v1150
        %v1165 = vunpack.c.h.b16 %v1150
        %v1166 = vunpack.c.l.b16 0
        %v1167 = vunpack.c.h.b16 0
        %vm1168 = vcmp.ne.s32.totalorder %v1164, %v1166
        %vm1169 = vcmp.ne.s32.totalorder %v1165, %v1167
        %vm1170 = vmpackc.low %vm1169, %vm1168
        %v1171 = vunpack.c.l.b16 %v1151
        %v1172 = vunpack.c.h.b16 %v1151
        %v1173 = vunpack.c.l.b16 0
        %v1174 = vunpack.c.h.b16 0
        %vm1175 = vcmp.ne.s32.totalorder %v1171, %v1173
        %vm1176 = vcmp.ne.s32.totalorder %v1172, %v1174
        %vm1177 = vmpackc.low %vm1176, %vm1175
        %v1178 = vunpack.c.l.b16 %v1152
        %v1179 = vunpack.c.h.b16 %v1152
        %v1180 = vunpack.c.l.b16 0
        %v1181 = vunpack.c.h.b16 0
        %vm1182 = vcmp.ne.s32.totalorder %v1178, %v1180
        %vm1183 = vcmp.ne.s32.totalorder %v1179, %v1181
        %vm1184 = vmpackc.low %vm1183, %vm1182
        %v1185 = vunpack.c.l.b16 %v1153
        %v1186 = vunpack.c.h.b16 %v1153
        %v1187 = vunpack.c.l.b16 0
        %v1188 = vunpack.c.h.b16 0
        %vm1189 = vcmp.ne.s32.totalorder %v1185, %v1187
        %vm1190 = vcmp.ne.s32.totalorder %v1186, %v1188
        %vm1191 = vmpackc.low %vm1190, %vm1189
        %v1192 = vunpack.c.l.b16 %v1154
        %v1193 = vunpack.c.h.b16 %v1154
        %v1194 = vunpack.c.l.b16 0
        %v1195 = vunpack.c.h.b16 0
        %vm1196 = vcmp.ne.s32.totalorder %v1192, %v1194
        %vm1197 = vcmp.ne.s32.totalorder %v1193, %v1195
        %vm1198 = vmpackc.low %vm1197, %vm1196
        %v1199 = vunpack.c.l.b16 %v1155
        %v1200 = vunpack.c.h.b16 %v1155
        %v1201 = vunpack.c.l.b16 0
        %v1202 = vunpack.c.h.b16 0
        %vm1203 = vcmp.ne.s32.totalorder %v1199, %v1201
        %vm1204 = vcmp.ne.s32.totalorder %v1200, %v1202
        %vm1205 = vmpackc.low %vm1204, %vm1203
        %v1206 = vunpack.c.l.b16 %v1156
        %v1207 = vunpack.c.h.b16 %v1156
        %v1208 = vunpack.c.l.b16 0
        %v1209 = vunpack.c.h.b16 0
        %vm1210 = vcmp.ne.s32.totalorder %v1206, %v1208
        %vm1211 = vcmp.ne.s32.totalorder %v1207, %v1209
        %vm1212 = vmpackc.low %vm1211, %vm1210
        %v1213 = vunpack.c.l.b16 %v1148
        %v1214 = vunpack.c.h.b16 %v1148
        %v1215 = vunpack.c.l.b16 0
        %v1216 = vunpack.c.h.b16 0
        %vm1217 = vcmp.ne.s32.totalorder %v1213, %v1215
        %vm1218 = vcmp.ne.s32.totalorder %v1214, %v1216
        %vm1219 = vmpackc.low %vm1218, %vm1217
        %v1220 = vsel %vm1163, %v693, 0
        %v1221 = vsel %vm1170, %v694, 0
        %v1222 = vsel %vm1177, %v695, 0
        %v1223 = vsel %vm1184, %v696, 0
        %v1224 = vsel %vm1191, %v697, 0
        %v1225 = vsel %vm1198, %v698, 0
        %v1226 = vsel %vm1205, %v699, 0
        %v1227 = vsel %vm1212, %v700, 0
        %v1228 = vsel %vm1219, %v713, 0
        %1229 = vrot.lane.b32.xlu0 %v837, 66
        %v1230 = vpop.permute.xlu0 %1229
        %1231 = vrot.lane.b32.xlu0 %v838, 66
        %v1232 = vpop.permute.xlu0 %1231
        %1233 = vrot.lane.b32.xlu0 %v839, 66
        %v1234 = vpop.permute.xlu0 %1233
        %1235 = vrot.lane.b32.xlu0 %v840, 66
        %v1236 = vpop.permute.xlu0 %1235
        %1237 = vrot.lane.b32.xlu0 %v841, 66
        %v1238 = vpop.permute.xlu0 %1237
        %1239 = vrot.lane.b32.xlu0 %v842, 66
        %v1240 = vpop.permute.xlu0 %1239
        %1241 = vrot.lane.b32.xlu0 %v843, 66
        %v1242 = vpop.permute.xlu0 %1241
        %1243 = vrot.lane.b32.xlu0 %v844, 66
        %v1244 = vpop.permute.xlu0 %1243
        %vm1245 = vcmask 539648
        %v1246 = vsel %vm1245, %v1230, %v1232
        %v1247 = vsel %vm1245, %v1232, %v1234
        %v1248 = vsel %vm1245, %v1234, %v1236
        %v1249 = vsel %vm1245, %v1236, %v1238
        %v1250 = vsel %vm1245, %v1238, %v1240
        %v1251 = vsel %vm1245, %v1240, %v1242
        %v1252 = vsel %vm1245, %v1242, %v1244
        %v1253 = vunpack.c.l.b16 %v1230
        %v1254 = vunpack.c.h.b16 %v1230
        %v1255 = vunpack.c.l.b16 0
        %v1256 = vunpack.c.h.b16 0
        %vm1257 = vcmp.ne.s32.totalorder %v1253, %v1255
        %vm1258 = vcmp.ne.s32.totalorder %v1254, %v1256
        %vm1259 = vmpackc.low %vm1258, %vm1257
        %v1260 = vunpack.c.l.b16 %v1246
        %v1261 = vunpack.c.h.b16 %v1246
        %v1262 = vunpack.c.l.b16 0
        %v1263 = vunpack.c.h.b16 0
        %vm1264 = vcmp.ne.s32.totalorder %v1260, %v1262
        %vm1265 = vcmp.ne.s32.totalorder %v1261, %v1263
        %vm1266 = vmpackc.low %vm1265, %vm1264
        %v1267 = vunpack.c.l.b16 %v1247
        %v1268 = vunpack.c.h.b16 %v1247
        %v1269 = vunpack.c.l.b16 0
        %v1270 = vunpack.c.h.b16 0
        %vm1271 = vcmp.ne.s32.totalorder %v1267, %v1269
        %vm1272 = vcmp.ne.s32.totalorder %v1268, %v1270
        %vm1273 = vmpackc.low %vm1272, %vm1271
        %v1274 = vunpack.c.l.b16 %v1248
        %v1275 = vunpack.c.h.b16 %v1248
        %v1276 = vunpack.c.l.b16 0
        %v1277 = vunpack.c.h.b16 0
        %vm1278 = vcmp.ne.s32.totalorder %v1274, %v1276
        %vm1279 = vcmp.ne.s32.totalorder %v1275, %v1277
        %vm1280 = vmpackc.low %vm1279, %vm1278
        %v1281 = vunpack.c.l.b16 %v1249
        %v1282 = vunpack.c.h.b16 %v1249
        %v1283 = vunpack.c.l.b16 0
        %v1284 = vunpack.c.h.b16 0
        %vm1285 = vcmp.ne.s32.totalorder %v1281, %v1283
        %vm1286 = vcmp.ne.s32.totalorder %v1282, %v1284
        %vm1287 = vmpackc.low %vm1286, %vm1285
        %v1288 = vunpack.c.l.b16 %v1250
        %v1289 = vunpack.c.h.b16 %v1250
        %v1290 = vunpack.c.l.b16 0
        %v1291 = vunpack.c.h.b16 0
        %vm1292 = vcmp.ne.s32.totalorder %v1288, %v1290
        %vm1293 = vcmp.ne.s32.totalorder %v1289, %v1291
        %vm1294 = vmpackc.low %vm1293, %vm1292
        %v1295 = vunpack.c.l.b16 %v1251
        %v1296 = vunpack.c.h.b16 %v1251
        %v1297 = vunpack.c.l.b16 0
        %v1298 = vunpack.c.h.b16 0
        %vm1299 = vcmp.ne.s32.totalorder %v1295, %v1297
        %vm1300 = vcmp.ne.s32.totalorder %v1296, %v1298
        %vm1301 = vmpackc.low %vm1300, %vm1299
        %v1302 = vunpack.c.l.b16 %v1252
        %v1303 = vunpack.c.h.b16 %v1252
        %v1304 = vunpack.c.l.b16 0
        %v1305 = vunpack.c.h.b16 0
        %vm1306 = vcmp.ne.s32.totalorder %v1302, %v1304
        %vm1307 = vcmp.ne.s32.totalorder %v1303, %v1305
        %vm1308 = vmpackc.low %vm1307, %vm1306
        %v1309 = vunpack.c.l.b16 %v1244
        %v1310 = vunpack.c.h.b16 %v1244
        %v1311 = vunpack.c.l.b16 0
        %v1312 = vunpack.c.h.b16 0
        %vm1313 = vcmp.ne.s32.totalorder %v1309, %v1311
        %vm1314 = vcmp.ne.s32.totalorder %v1310, %v1312
        %vm1315 = vmpackc.low %vm1314, %vm1313
        %v1316 = vsel %vm1259, %v693, 0
        %v1317 = vsel %vm1266, %v694, 0
        %v1318 = vsel %vm1273, %v695, 0
        %v1319 = vsel %vm1280, %v696, 0
        %v1320 = vsel %vm1287, %v697, 0
        %v1321 = vsel %vm1294, %v698, 0
        %v1322 = vsel %vm1301, %v699, 0
        %v1323 = vsel %vm1308, %v700, 0
        %v1324 = vsel %vm1315, %v713, 0
        %1325 = vrot.lane.b32.xlu0 %v693, 127
        %v1326 = vpop.permute.xlu0 %1325
        %1327 = vrot.lane.b32.xlu0 %v694, 127
        %v1328 = vpop.permute.xlu0 %1327
        %1329 = vrot.lane.b32.xlu0 %v695, 127
        %v1330 = vpop.permute.xlu0 %1329
        %1331 = vrot.lane.b32.xlu0 %v696, 127
        %v1332 = vpop.permute.xlu0 %1331
        %1333 = vrot.lane.b32.xlu0 %v697, 127
        %v1334 = vpop.permute.xlu0 %1333
        %1335 = vrot.lane.b32.xlu0 %v698, 127
        %v1336 = vpop.permute.xlu0 %1335
        %1337 = vrot.lane.b32.xlu0 %v699, 127
        %v1338 = vpop.permute.xlu0 %1337
        %1339 = vrot.lane.b32.xlu0 %v700, 127
        %v1340 = vpop.permute.xlu0 %1339
        %1341 = vrot.lane.b32.xlu0 %v713, 127
        %v1342 = vpop.permute.xlu0 %1341
        %vm1343 = vcmask 1039360
        %v1344 = vsel %vm1343, %v1326, %v1328
        %v1345 = vsel %vm1343, %v1328, %v1330
        %v1346 = vsel %vm1343, %v1330, %v1332
        %v1347 = vsel %vm1343, %v1332, %v1334
        %v1348 = vsel %vm1343, %v1334, %v1336
        %v1349 = vsel %vm1343, %v1336, %v1338
        %v1350 = vsel %vm1343, %v1338, %v1340
        %v1351 = vsel %vm1343, %v1340, %v1342
        %1369 = vrot.lane.b32.xlu0 %v932, 126
        %v1370 = vpop.permute.xlu0 %1369
        %1371 = vrot.lane.b32.xlu0 %v933, 126
        %v1372 = vpop.permute.xlu0 %1371
        %1373 = vrot.lane.b32.xlu0 %v934, 126
        %v1374 = vpop.permute.xlu0 %1373
        %1375 = vrot.lane.b32.xlu0 %v935, 126
        %v1376 = vpop.permute.xlu0 %1375
        %1377 = vrot.lane.b32.xlu0 %v936, 126
        %v1378 = vpop.permute.xlu0 %1377
        %1379 = vrot.lane.b32.xlu0 %v937, 126
        %v1380 = vpop.permute.xlu0 %1379
        %1381 = vrot.lane.b32.xlu0 %v938, 126
        %v1382 = vpop.permute.xlu0 %1381
        %1383 = vrot.lane.b32.xlu0 %v939, 126
        %v1384 = vpop.permute.xlu0 %1383
        %1385 = vrot.lane.b32.xlu0 %v940, 126
        %v1386 = vpop.permute.xlu0 %1385
        %vm1387 = vcmask 1031168
        %v1388 = vsel %vm1387, %v1370, %v1372
        %v1389 = vsel %vm1387, %v1372, %v1374
        %v1390 = vsel %vm1387, %v1374, %v1376
        %v1391 = vsel %vm1387, %v1376, %v1378
        %v1392 = vsel %vm1387, %v1378, %v1380
        %v1393 = vsel %vm1387, %v1380, %v1382
        %v1394 = vsel %vm1387, %v1382, %v1384
        %v1395 = vsel %vm1387, %v1384, %v1386
        %1413 = vrot.lane.b32.xlu0 %v1028, 96
        %v1414 = vpop.permute.xlu0 %1413
        %1415 = vrot.lane.b32.xlu0 %v1029, 96
        %v1416 = vpop.permute.xlu0 %1415
        %1417 = vrot.lane.b32.xlu0 %v1030, 96
        %v1418 = vpop.permute.xlu0 %1417
        %1419 = vrot.lane.b32.xlu0 %v1031, 96
        %v1420 = vpop.permute.xlu0 %1419
        %1421 = vrot.lane.b32.xlu0 %v1032, 96
        %v1422 = vpop.permute.xlu0 %1421
        %1423 = vrot.lane.b32.xlu0 %v1033, 96
        %v1424 = vpop.permute.xlu0 %1423
        %1425 = vrot.lane.b32.xlu0 %v1034, 96
        %v1426 = vpop.permute.xlu0 %1425
        %1427 = vrot.lane.b32.xlu0 %v1035, 96
        %v1428 = vpop.permute.xlu0 %1427
        %1429 = vrot.lane.b32.xlu0 %v1036, 96
        %v1430 = vpop.permute.xlu0 %1429
        %vm1431 = vcmask 785408
        %v1432 = vsel %vm1431, %v1414, %v1416
        %v1433 = vsel %vm1431, %v1416, %v1418
        %v1434 = vsel %vm1431, %v1418, %v1420
        %v1435 = vsel %vm1431, %v1420, %v1422
        %v1436 = vsel %vm1431, %v1422, %v1424
        %v1437 = vsel %vm1431, %v1424, %v1426
        %v1438 = vsel %vm1431, %v1426, %v1428
        %v1439 = vsel %vm1431, %v1428, %v1430
        %1448 = vrot.lane.b32.xlu0 %v693, 95
        %v1449 = vpop.permute.xlu0 %1448
        %1450 = vrot.lane.b32.xlu0 %v694, 95
        %v1451 = vpop.permute.xlu0 %1450
        %1452 = vrot.lane.b32.xlu0 %v695, 95
        %v1453 = vpop.permute.xlu0 %1452
        %1454 = vrot.lane.b32.xlu0 %v696, 95
        %v1455 = vpop.permute.xlu0 %1454
        %1456 = vrot.lane.b32.xlu0 %v697, 95
        %v1457 = vpop.permute.xlu0 %1456
        %1458 = vrot.lane.b32.xlu0 %v698, 95
        %v1459 = vpop.permute.xlu0 %1458
        %1460 = vrot.lane.b32.xlu0 %v699, 95
        %v1461 = vpop.permute.xlu0 %1460
        %1462 = vrot.lane.b32.xlu0 %v700, 95
        %v1463 = vpop.permute.xlu0 %1462
        %1464 = vrot.lane.b32.xlu0 %v713, 95
        %v1465 = vpop.permute.xlu0 %1464
        %vm1466 = vcmask 777216
        %v1467 = vsel %vm1466, %v1449, %v1451
        %v1468 = vsel %vm1466, %v1451, %v1453
        %v1469 = vsel %vm1466, %v1453, %v1455
        %v1470 = vsel %vm1466, %v1455, %v1457
        %v1471 = vsel %vm1466, %v1457, %v1459
        %v1472 = vsel %vm1466, %v1459, %v1461
        %v1473 = vsel %vm1466, %v1461, %v1463
        %v1474 = vsel %vm1466, %v1463, %v1465
        %1492 = vrot.lane.b32.xlu0 %v1124, 94
        %v1493 = vpop.permute.xlu0 %1492
        %1494 = vrot.lane.b32.xlu0 %v1125, 94
        %v1495 = vpop.permute.xlu0 %1494
        %1496 = vrot.lane.b32.xlu0 %v1126, 94
        %v1497 = vpop.permute.xlu0 %1496
        %1498 = vrot.lane.b32.xlu0 %v1127, 94
        %v1499 = vpop.permute.xlu0 %1498
        %1500 = vrot.lane.b32.xlu0 %v1128, 94
        %v1501 = vpop.permute.xlu0 %1500
        %1502 = vrot.lane.b32.xlu0 %v1129, 94
        %v1503 = vpop.permute.xlu0 %1502
        %1504 = vrot.lane.b32.xlu0 %v1130, 94
        %v1505 = vpop.permute.xlu0 %1504
        %1506 = vrot.lane.b32.xlu0 %v1131, 94
        %v1507 = vpop.permute.xlu0 %1506
        %1508 = vrot.lane.b32.xlu0 %v1132, 94
        %v1509 = vpop.permute.xlu0 %1508
        %vm1510 = vcmask 769024
        %v1511 = vsel %vm1510, %v1493, %v1495
        %v1512 = vsel %vm1510, %v1495, %v1497
        %v1513 = vsel %vm1510, %v1497, %v1499
        %v1514 = vsel %vm1510, %v1499, %v1501
        %v1515 = vsel %vm1510, %v1501, %v1503
        %v1516 = vsel %vm1510, %v1503, %v1505
        %v1517 = vsel %vm1510, %v1505, %v1507
        %v1518 = vsel %vm1510, %v1507, %v1509
        %1536 = vrot.lane.b32.xlu0 %v1220, 64
        %v1537 = vpop.permute.xlu0 %1536
        %1538 = vrot.lane.b32.xlu0 %v1221, 64
        %v1539 = vpop.permute.xlu0 %1538
        %1540 = vrot.lane.b32.xlu0 %v1222, 64
        %v1541 = vpop.permute.xlu0 %1540
        %1542 = vrot.lane.b32.xlu0 %v1223, 64
        %v1543 = vpop.permute.xlu0 %1542
        %1544 = vrot.lane.b32.xlu0 %v1224, 64
        %v1545 = vpop.permute.xlu0 %1544
        %1546 = vrot.lane.b32.xlu0 %v1225, 64
        %v1547 = vpop.permute.xlu0 %1546
        %1548 = vrot.lane.b32.xlu0 %v1226, 64
        %v1549 = vpop.permute.xlu0 %1548
        %1550 = vrot.lane.b32.xlu0 %v1227, 64
        %v1551 = vpop.permute.xlu0 %1550
        %1552 = vrot.lane.b32.xlu0 %v1228, 64
        %v1553 = vpop.permute.xlu0 %1552
        %v1554 = vsel %vm1149, %v1537, %v1539
        %v1555 = vsel %vm1149, %v1539, %v1541
        %v1556 = vsel %vm1149, %v1541, %v1543
        %v1557 = vsel %vm1149, %v1543, %v1545
        %v1558 = vsel %vm1149, %v1545, %v1547
        %v1559 = vsel %vm1149, %v1547, %v1549
        %v1560 = vsel %vm1149, %v1549, %v1551
        %v1561 = vsel %vm1149, %v1551, %v1553
        %1570 = vrot.lane.b32.xlu0 %v693, 63
        %v1571 = vpop.permute.xlu0 %1570
        %1572 = vrot.lane.b32.xlu0 %v694, 63
        %v1573 = vpop.permute.xlu0 %1572
        %1574 = vrot.lane.b32.xlu0 %v695, 63
        %v1575 = vpop.permute.xlu0 %1574
        %1576 = vrot.lane.b32.xlu0 %v696, 63
        %v1577 = vpop.permute.xlu0 %1576
        %1578 = vrot.lane.b32.xlu0 %v697, 63
        %v1579 = vpop.permute.xlu0 %1578
        %1580 = vrot.lane.b32.xlu0 %v698, 63
        %v1581 = vpop.permute.xlu0 %1580
        %1582 = vrot.lane.b32.xlu0 %v699, 63
        %v1583 = vpop.permute.xlu0 %1582
        %1584 = vrot.lane.b32.xlu0 %v700, 63
        %v1585 = vpop.permute.xlu0 %1584
        %1586 = vrot.lane.b32.xlu0 %v713, 63
        %v1587 = vpop.permute.xlu0 %1586
        %vm1588 = vcmask 515072
        %v1589 = vsel %vm1588, %v1571, %v1573
        %v1590 = vsel %vm1588, %v1573, %v1575
        %v1591 = vsel %vm1588, %v1575, %v1577
        %v1592 = vsel %vm1588, %v1577, %v1579
        %v1593 = vsel %vm1588, %v1579, %v1581
        %v1594 = vsel %vm1588, %v1581, %v1583
        %v1595 = vsel %vm1588, %v1583, %v1585
        %v1596 = vsel %vm1588, %v1585, %v1587
        %1614 = vrot.lane.b32.xlu0 %v1316, 62
        %v1615 = vpop.permute.xlu0 %1614
        %1616 = vrot.lane.b32.xlu0 %v1317, 62
        %v1617 = vpop.permute.xlu0 %1616
        %1618 = vrot.lane.b32.xlu0 %v1318, 62
        %v1619 = vpop.permute.xlu0 %1618
        %1620 = vrot.lane.b32.xlu0 %v1319, 62
        %v1621 = vpop.permute.xlu0 %1620
        %1622 = vrot.lane.b32.xlu0 %v1320, 62
        %v1623 = vpop.permute.xlu0 %1622
        %1624 = vrot.lane.b32.xlu0 %v1321, 62
        %v1625 = vpop.permute.xlu0 %1624
        %1626 = vrot.lane.b32.xlu0 %v1322, 62
        %v1627 = vpop.permute.xlu0 %1626
        %1628 = vrot.lane.b32.xlu0 %v1323, 62
        %v1629 = vpop.permute.xlu0 %1628
        %1630 = vrot.lane.b32.xlu0 %v1324, 62
        %v1631 = vpop.permute.xlu0 %1630
        %vm1632 = vcmask 506880
        %v1633 = vsel %vm1632, %v1615, %v1617
        %v1634 = vsel %vm1632, %v1617, %v1619
        %v1635 = vsel %vm1632, %v1619, %v1621
        %v1636 = vsel %vm1632, %v1621, %v1623
        %v1637 = vsel %vm1632, %v1623, %v1625
        %v1638 = vsel %vm1632, %v1625, %v1627
        %v1639 = vsel %vm1632, %v1627, %v1629
        %v1640 = vsel %vm1632, %v1629, %v1631
        %v1649 = vld [vmem:[%s1] sm:$0xff]
        %v1651 = vunpack.c.l.b16 %v1649
        %v1652 = vunpack.c.h.b16 %v1649
        %v1653 = vpack.c.b16 %v1651, %v1651
        %v1654 = vpack.c.b16 %v1652, %v1652
        %vm1656 = vcmask 130048
        %v1658 = vsel %vm1656, %v1654, 0
        %1660 = vmatpush.bf16.msra.mxu0 %v1589
        %1661 = vmatpush.bf16.msra.mxu0 %v1554
        %1662 = vmatpush.bf16.msra.mxu0 %v1511
        %1663 = vmatpush.bf16.msra.mxu0 %v1467
        %1664 = vmatpush.bf16.msra.mxu0 %v1432
        %1665 = vmatpush.bf16.msra.mxu0 %v1388
        %1666 = vmatpush.bf16.msra.mxu0 %v1344
        %1667 = vmatpush.bf16.msra.mxu0 %v804
        %1668 = vmatmul.bf16.gmra.mxu0 %v1653
        %v1669 = vpop.f32.mrf.mxu0
        %v1670 = vadd.f32 0.0, %v1669
        %v1671 = vpop.f32.mrf.mxu0
        %1672 = vdwg.mxu0
        %1673 = vmatpush.bf16.msra.mxu0 0
        %1674 = vmatpush.bf16.msra.mxu0 0
        %1675 = vmatpush.bf16.msra.mxu0 0
        %1676 = vmatpush.bf16.msra.mxu0 0
        %1677 = vmatpush.bf16.msra.mxu0 0
        %1678 = vmatpush.bf16.msra.mxu0 0
        %1679 = vmatpush.bf16.msra.mxu0 0
        %1680 = vmatpush.bf16.msra.mxu0 %v1633
        %1681 = vmatmul.bf16.gmra.mxu0 %v1658
        %v1682 = vpop.f32.mrf.mxu0
        %v1683 = vadd.f32 %v1670, %v1682
        %v1684 = vpop.f32.mrf.mxu0
        %1685 = vdwg.mxu0
        %1686 = vmatpush.bf16.msra.mxu0 %v1590
        %1687 = vmatpush.bf16.msra.mxu0 %v1555
        %1688 = vmatpush.bf16.msra.mxu0 %v1512
        %1689 = vmatpush.bf16.msra.mxu0 %v1468
        %1690 = vmatpush.bf16.msra.mxu0 %v1433
        %1691 = vmatpush.bf16.msra.mxu0 %v1389
        %1692 = vmatpush.bf16.msra.mxu0 %v1345
        %1693 = vmatpush.bf16.msra.mxu0 %v805
        %1694 = vmatmul.bf16.gmra.mxu0 %v1653
        %v1695 = vpop.f32.mrf.mxu0
        %v1696 = vadd.f32 0.0, %v1695
        %v1697 = vpop.f32.mrf.mxu0
        %1698 = vdwg.mxu0
        %1699 = vmatpush.bf16.msra.mxu0 0
        %1700 = vmatpush.bf16.msra.mxu0 0
        %1701 = vmatpush.bf16.msra.mxu0 0
        %1702 = vmatpush.bf16.msra.mxu0 0
        %1703 = vmatpush.bf16.msra.mxu0 0
        %1704 = vmatpush.bf16.msra.mxu0 0
        %1705 = vmatpush.bf16.msra.mxu0 0
        %1706 = vmatpush.bf16.msra.mxu0 %v1634
        %1707 = vmatmul.bf16.gmra.mxu0 %v1658
        %v1708 = vpop.f32.mrf.mxu0
        %v1709 = vadd.f32 %v1696, %v1708
        %v1710 = vpop.f32.mrf.mxu0
        %1711 = vdwg.mxu0
        %1712 = vmatpush.bf16.msra.mxu0 %v1591
        %1713 = vmatpush.bf16.msra.mxu0 %v1556
        %1714 = vmatpush.bf16.msra.mxu0 %v1513
        %1715 = vmatpush.bf16.msra.mxu0 %v1469
        %1716 = vmatpush.bf16.msra.mxu0 %v1434
        %1717 = vmatpush.bf16.msra.mxu0 %v1390
        %1718 = vmatpush.bf16.msra.mxu0 %v1346
        %1719 = vmatpush.bf16.msra.mxu0 %v806
        %1720 = vmatmul.bf16.gmra.mxu0 %v1653
        %v1721 = vpop.f32.mrf.mxu0
        %v1722 = vadd.f32 0.0, %v1721
        %v1723 = vpop.f32.mrf.mxu0
        %1724 = vdwg.mxu0
        %1725 = vmatpush.bf16.msra.mxu0 0
        %1726 = vmatpush.bf16.msra.mxu0 0
        %1727 = vmatpush.bf16.msra.mxu0 0
        %1728 = vmatpush.bf16.msra.mxu0 0
        %1729 = vmatpush.bf16.msra.mxu0 0
        %1730 = vmatpush.bf16.msra.mxu0 0
        %1731 = vmatpush.bf16.msra.mxu0 0
        %1732 = vmatpush.bf16.msra.mxu0 %v1635
        %1733 = vmatmul.bf16.gmra.mxu0 %v1658
        %v1734 = vpop.f32.mrf.mxu0
        %v1735 = vadd.f32 %v1722, %v1734
        %v1736 = vpop.f32.mrf.mxu0
        %1737 = vdwg.mxu0
        %1738 = vmatpush.bf16.msra.mxu0 %v1592
        %1739 = vmatpush.bf16.msra.mxu0 %v1557
        %1740 = vmatpush.bf16.msra.mxu0 %v1514
        %1741 = vmatpush.bf16.msra.mxu0 %v1470
        %1742 = vmatpush.bf16.msra.mxu0 %v1435
        %1743 = vmatpush.bf16.msra.mxu0 %v1391
        %1744 = vmatpush.bf16.msra.mxu0 %v1347
        %1745 = vmatpush.bf16.msra.mxu0 %v807
        %1746 = vmatmul.bf16.gmra.mxu0 %v1653
        %v1747 = vpop.f32.mrf.mxu0
        %v1748 = vadd.f32 0.0, %v1747
        %v1749 = vpop.f32.mrf.mxu0
        %1750 = vdwg.mxu0
        %1751 = vmatpush.bf16.msra.mxu0 0
        %1752 = vmatpush.bf16.msra.mxu0 0
        %1753 = vmatpush.bf16.msra.mxu0 0
        %1754 = vmatpush.bf16.msra.mxu0 0
        %1755 = vmatpush.bf16.msra.mxu0 0
        %1756 = vmatpush.bf16.msra.mxu0 0
        %1757 = vmatpush.bf16.msra.mxu0 0
        %1758 = vmatpush.bf16.msra.mxu0 %v1636
        %1759 = vmatmul.bf16.gmra.mxu0 %v1658
        %v1760 = vpop.f32.mrf.mxu0
        %v1761 = vadd.f32 %v1748, %v1760
        %v1762 = vpop.f32.mrf.mxu0
        %1763 = vdwg.mxu0
        %1764 = vmatpush.bf16.msra.mxu0 %v1593
        %1765 = vmatpush.bf16.msra.mxu0 %v1558
        %1766 = vmatpush.bf16.msra.mxu0 %v1515
        %1767 = vmatpush.bf16.msra.mxu0 %v1471
        %1768 = vmatpush.bf16.msra.mxu0 %v1436
        %1769 = vmatpush.bf16.msra.mxu0 %v1392
        %1770 = vmatpush.bf16.msra.mxu0 %v1348
        %1771 = vmatpush.bf16.msra.mxu0 %v808
        %1772 = vmatmul.bf16.gmra.mxu0 %v1653
        %v1773 = vpop.f32.mrf.mxu0
        %v1774 = vadd.f32 0.0, %v1773
        %v1775 = vpop.f32.mrf.mxu0
        %1776 = vdwg.mxu0
        %1777 = vmatpush.bf16.msra.mxu0 0
        %1778 = vmatpush.bf16.msra.mxu0 0
        %1779 = vmatpush.bf16.msra.mxu0 0
        %1780 = vmatpush.bf16.msra.mxu0 0
        %1781 = vmatpush.bf16.msra.mxu0 0
        %1782 = vmatpush.bf16.msra.mxu0 0
        %1783 = vmatpush.bf16.msra.mxu0 0
        %1784 = vmatpush.bf16.msra.mxu0 %v1637
        %1785 = vmatmul.bf16.gmra.mxu0 %v1658
        %v1786 = vpop.f32.mrf.mxu0
        %v1787 = vadd.f32 %v1774, %v1786
        %v1788 = vpop.f32.mrf.mxu0
        %1789 = vdwg.mxu0
        %1790 = vmatpush.bf16.msra.mxu0 %v1594
        %1791 = vmatpush.bf16.msra.mxu0 %v1559
        %1792 = vmatpush.bf16.msra.mxu0 %v1516
        %1793 = vmatpush.bf16.msra.mxu0 %v1472
        %1794 = vmatpush.bf16.msra.mxu0 %v1437
        %1795 = vmatpush.bf16.msra.mxu0 %v1393
        %1796 = vmatpush.bf16.msra.mxu0 %v1349
        %1797 = vmatpush.bf16.msra.mxu0 %v809
        %1798 = vmatmul.bf16.gmra.mxu0 %v1653
        %v1799 = vpop.f32.mrf.mxu0
        %v1800 = vadd.f32 0.0, %v1799
        %v1801 = vpop.f32.mrf.mxu0
        %1802 = vdwg.mxu0
        %1803 = vmatpush.bf16.msra.mxu0 0
        %1804 = vmatpush.bf16.msra.mxu0 0
        %1805 = vmatpush.bf16.msra.mxu0 0
        %1806 = vmatpush.bf16.msra.mxu0 0
        %1807 = vmatpush.bf16.msra.mxu0 0
        %1808 = vmatpush.bf16.msra.mxu0 0
        %1809 = vmatpush.bf16.msra.mxu0 0
        %1810 = vmatpush.bf16.msra.mxu0 %v1638
        %1811 = vmatmul.bf16.gmra.mxu0 %v1658
        %v1812 = vpop.f32.mrf.mxu0
        %v1813 = vadd.f32 %v1800, %v1812
        %v1814 = vpop.f32.mrf.mxu0
        %1815 = vdwg.mxu0
        %1816 = vmatpush.bf16.msra.mxu0 %v1595
        %1817 = vmatpush.bf16.msra.mxu0 %v1560
        %1818 = vmatpush.bf16.msra.mxu0 %v1517
        %1819 = vmatpush.bf16.msra.mxu0 %v1473
        %1820 = vmatpush.bf16.msra.mxu0 %v1438
        %1821 = vmatpush.bf16.msra.mxu0 %v1394
        %1822 = vmatpush.bf16.msra.mxu0 %v1350
        %1823 = vmatpush.bf16.msra.mxu0 %v810
        %1824 = vmatmul.bf16.gmra.mxu0 %v1653
        %v1825 = vpop.f32.mrf.mxu0
        %v1826 = vadd.f32 0.0, %v1825
        %v1827 = vpop.f32.mrf.mxu0
        %1828 = vdwg.mxu0
        %1829 = vmatpush.bf16.msra.mxu0 0
        %1830 = vmatpush.bf16.msra.mxu0 0
        %1831 = vmatpush.bf16.msra.mxu0 0
        %1832 = vmatpush.bf16.msra.mxu0 0
        %1833 = vmatpush.bf16.msra.mxu0 0
        %1834 = vmatpush.bf16.msra.mxu0 0
        %1835 = vmatpush.bf16.msra.mxu0 0
        %1836 = vmatpush.bf16.msra.mxu0 %v1639
        %1837 = vmatmul.bf16.gmra.mxu0 %v1658
        %v1838 = vpop.f32.mrf.mxu0
        %v1839 = vadd.f32 %v1826, %v1838
        %v1840 = vpop.f32.mrf.mxu0
        %1841 = vdwg.mxu0
        %1842 = vmatpush.bf16.msra.mxu0 %v1596
        %1843 = vmatpush.bf16.msra.mxu0 %v1561
        %1844 = vmatpush.bf16.msra.mxu0 %v1518
        %1845 = vmatpush.bf16.msra.mxu0 %v1474
        %1846 = vmatpush.bf16.msra.mxu0 %v1439
        %1847 = vmatpush.bf16.msra.mxu0 %v1395
        %1848 = vmatpush.bf16.msra.mxu0 %v1351
        %1849 = vmatpush.bf16.msra.mxu0 %v811
        %1850 = vmatmul.bf16.gmra.mxu0 %v1653
        %v1851 = vpop.f32.mrf.mxu0
        %v1852 = vadd.f32 0.0, %v1851
        %v1853 = vpop.f32.mrf.mxu0
        %1854 = vdwg.mxu0
        %1855 = vmatpush.bf16.msra.mxu0 0
        %1856 = vmatpush.bf16.msra.mxu0 0
        %1857 = vmatpush.bf16.msra.mxu0 0
        %1858 = vmatpush.bf16.msra.mxu0 0
        %1859 = vmatpush.bf16.msra.mxu0 0
        %1860 = vmatpush.bf16.msra.mxu0 0
        %1861 = vmatpush.bf16.msra.mxu0 0
        %1862 = vmatpush.bf16.msra.mxu0 %v1640
        %1863 = vmatmul.bf16.gmra.mxu0 %v1658
        %v1864 = vpop.f32.mrf.mxu0
        %v1865 = vadd.f32 %v1852, %v1864
        %v1866 = vpop.f32.mrf.mxu0
        %1867 = vdwg.mxu0
        %v1868 = vpack.c.bf16 %v1709, %v1683
        %v1869 = vpack.c.bf16 %v1761, %v1735
        %v1870 = vpack.c.bf16 %v1813, %v1787
        %v1871 = vpack.c.bf16 %v1865, %v1839
        %1872 = vst [vmem:[%s644] sm:$0xff] %v1868
        %1873 = vst [vmem:[%s644 + $0x8] sm:$0xff] %v1869
        %1874 = vst [vmem:[%s644 + $0x10] sm:$0xff] %v1870
        %1875 = vst [vmem:[%s644 + $0x18] sm:$0xff] %v1871
        %v1876 = vadd.f32 %v1683, %v1709
        %v1877 = vadd.f32 %v1876, %v1735
        %v1878 = vadd.f32 %v1877, %v1761
        %v1879 = vadd.f32 %v1878, %v1787
        %v1880 = vadd.f32 %v1879, %v1813
        %v1881 = vadd.f32 %v1880, %v1839
        %v1882 = vadd.f32 %v1881, %v1865
        %1883 = vadd.xlane.f32.xlu0 %v1882
        %v1884 = vpop.xlane.xlu0 %1883
        %v1885 = vmul.f32 %v1683, %v1683
        %v1886 = vmul.f32 %v1709, %v1709
        %v1887 = vmul.f32 %v1735, %v1735
        %v1888 = vmul.f32 %v1761, %v1761
        %v1889 = vmul.f32 %v1787, %v1787
        %v1890 = vmul.f32 %v1813, %v1813
        %v1891 = vmul.f32 %v1839, %v1839
        %v1892 = vmul.f32 %v1865, %v1865
        %v1893 = vadd.f32 %v1885, %v1886
        %v1894 = vadd.f32 %v1893, %v1887
        %v1895 = vadd.f32 %v1894, %v1888
        %v1896 = vadd.f32 %v1895, %v1889
        %v1897 = vadd.f32 %v1896, %v1890
        %v1898 = vadd.f32 %v1897, %v1891
        %v1899 = vadd.f32 %v1898, %v1892
        %1900 = vadd.xlane.f32.xlu0 %v1899
        %v1901 = vpop.xlane.xlu0 %1900
        %vm1902 = vcmask 7168
        %v1903 = vsel %vm1902, %v1884, %v1901
        %vm1904 = vcmask 15360
        %1905 = vst.msk [vmem:[%s652] sm:$0xff] %vm1904, %v1903
        %s1906 = smul.u32 8, %s22
        %p1907 = scmp.lt.s32.totalorder %s21, 1
        %s1908 = scalar_select %p1907, %s21, 1
        %p1909 = scmp.lt.s32.totalorder %s1906, 7
        %s1910 = scalar_select %p1909, %s1906, 7
        %s1911 = smul.addr %s1908, 8
        %s1912 = sadd.s32 %s1910, %s1911
        %s1913 = smul.addr %s1912, 4
        %s1914 = scalar_lea.vmem %s4, %s1913
        %p1915 = scmp.lt.s32.totalorder %s21, 1
        %s1916 = scalar_select %p1915, %s21, 1
        %p1917 = scmp.lt.s32.totalorder %s22, 0
        %s1918 = scalar_select %p1917, %s22, 0
        %s1919 = sadd.s32 %s1918, %s1916
        %s1920 = smul.addr %s1919, 8
        %s1921 = scalar_lea.vmem %s5, %s1920
        // Predicated region
        $region144: #{upsample_conv_forward.2} parent=134 // pred_check
          %p1922 = pneg %p156
        $region145: #{upsample_conv_forward.2} parent=134 // pred_check_branch
          %1924 = sbr.rel (%p1922) target = $region147
        $region146: #{upsample_conv_forward.2} parent=134 // pred_region
          %s1925 = smul.u32 8, %s22
        $region147: #{upsample_conv_forward.2} parent=134 // pred_fallthru
          _
        // Predicated region
        $region148: #{upsample_conv_forward.2} parent=134 // pred_check
          %p1926 = pneg %p184
        $region149: #{upsample_conv_forward.2} parent=134 // pred_check_branch
          %1928 = sbr.rel (%p1926) target = $region151
        $region150: #{upsample_conv_forward.2} parent=134 // pred_region
          _
        $region151: #{upsample_conv_forward.2} parent=134 // pred_fallthru
          _
      $region135: #{upsample_conv_forward.2} parent=5 // pred_fallthru
        _
      %p1929 = scmp.le.s32.totalorder 2, %s12
      // Predicated region
      $region152: #{upsample_conv_forward.2} parent=5 // pred_check
        %p1930 = pneg %p1929
      $region153: #{upsample_conv_forward.2} parent=5 // pred_check_branch
        %1932 = sbr.rel (%p1930) target = $region155
      $region154: #{upsample_conv_forward.2} parent=5 // pred_region
        %s1933 = ssub.s32 %s12, 2
        // Predicated region
        $region156: #{upsample_conv_forward.2} parent=154 // pred_check
          %p1934 = pneg %p162
        $region157: #{upsample_conv_forward.2} parent=154 // pred_check_branch
          %1936 = sbr.rel (%p1934) target = $region159
        $region158: #{upsample_conv_forward.2} parent=154 // pred_region
          %s1937 = smul.u32 8, %s24
          %p1938 = scmp.lt.s32.totalorder %s23, 1
          %s1939 = scalar_select %p1938, %s23, 1
          %p1940 = scmp.lt.s32.totalorder %s1937, 7
          %s1941 = scalar_select %p1940, %s1937, 7
          %s1942 = smul.addr %s1939, 8
          %s1943 = sadd.s32 %s1941, %s1942
          %s1944 = smul.addr %s1943, 4
          %s1945 = scalar_lea.vmem %s4, %s1944
        $region159: #{upsample_conv_forward.2} parent=154 // pred_fallthru
          _
        // Predicated region
        $region160: #{upsample_conv_forward.2} parent=154 // pred_check
          %p1946 = pneg %p190
        $region161: #{upsample_conv_forward.2} parent=154 // pred_check_branch
          %1948 = sbr.rel (%p1946) target = $region163
        $region162: #{upsample_conv_forward.2} parent=154 // pred_region
          %p1949 = scmp.lt.s32.totalorder %s23, 1
          %s1950 = scalar_select %p1949, %s23, 1
          %p1951 = scmp.lt.s32.totalorder %s24, 0
          %s1952 = scalar_select %p1951, %s24, 0
          %s1953 = sadd.s32 %s1952, %s1950
          %s1954 = smul.addr %s1953, 8
          %s1955 = scalar_lea.vmem %s5, %s1954
        $region163: #{upsample_conv_forward.2} parent=154 // pred_fallthru
          _
      $region155: #{upsample_conv_forward.2} parent=5 // pred_fallthru
        _
    $region6: #{upsample_conv_forward.2} parent=1 // loop_footer
      %s16 = sadd.s32 1, %s12
    $region7: #{upsample_conv_forward.2} parent=1 // loop_footer_branch
      %11 = sbr.rel target = $region3
    $region8: #{upsample_conv_forward.2} parent=1 // loop_exit
      _

</llo_original>
